<compile_context>
chip_gen: v7x
topology: tpu7x:2x2x1
jax: 0.10.0
libtpu: 0.0.40
codegen_flags: <defaults>
</compile_context>

<pallas_src>
import jax
import jax.numpy as jnp
from jax.experimental import pallas as pl
from jax.experimental.pallas import tpu as pltpu


# ---------------------------------------------------------------------------
# helpers
# ---------------------------------------------------------------------------

def _round_up(x, m):
    return (x + m - 1) // m * m


def _pick_bm(m_rows):
    """Pick an M tile: multiple of 8, <=256, and >=2 tiles when possible (v7x 2 TCs)."""
    mp = _round_up(m_rows, 8)
    if mp >= 512:
        return 256
    if mp >= 16:
        return _round_up(mp // 2, 8)
    return mp


def _pad_vec(v, c_pad):
    v = v.astype(jnp.float32)
    c = v.shape[0]
    if c_pad != c:
        v = jnp.pad(v, (0, c_pad - c))
    return v.reshape(1, c_pad)


# ---------------------------------------------------------------------------
# Pallas kernels
# ---------------------------------------------------------------------------

def _bn_relu_kernel(x_ref, s_ref, b_ref, o_ref):
    # compute in f32 (v5e has no bf16 VPU), store bf16
    y = x_ref[...].astype(jnp.float32) * s_ref[...] + b_ref[...]
    o_ref[...] = jnp.maximum(y, 0.0).astype(o_ref.dtype)


def _make_gemm_kernel(has_res, has_bn, has_next):
    """GEMM (bf16 x bf16 -> f32) with optional residual-add / BN+ReLU epilogues."""
    def kernel(*refs):
        i = 0
        lhs_ref = refs[i]; i += 1
        rhs_ref = refs[i]; i += 1
        if has_res:
            res_ref = refs[i]; i += 1
        if has_bn:
            s_ref, b_ref = refs[i], refs[i + 1]; i += 2
        if has_next:
            ns_ref, nb_ref = refs[i], refs[i + 1]; i += 2
        out_ref = refs[i]; i += 1

        acc = jnp.dot(lhs_ref[...], rhs_ref[...],
                      preferred_element_type=jnp.float32)
        if has_res:
            acc = acc + res_ref[...].astype(jnp.float32)
        if has_bn:
            acc = jnp.maximum(acc * s_ref[...] + b_ref[...], 0.0)
        out_ref[...] = acc.astype(out_ref.dtype)
        if has_next:
            act_ref = refs[i]
            act = jnp.maximum(acc * ns_ref[...] + nb_ref[...], 0.0)
            act_ref[...] = act.astype(act_ref.dtype)
    return kernel


# ---------------------------------------------------------------------------
# Pallas wrappers
# ---------------------------------------------------------------------------

def bn_relu(x, scale, bias):
    """y = relu(x * scale + bias), per-channel (folded eval BN). NHWC in/out, bf16 out."""
    N, H, W, C = x.shape
    L = W * C                      # lane axis = W*C (denser than C alone for narrow layers)
    R = N * H
    x2 = x.reshape(R, L)
    s2 = jnp.tile(scale.astype(jnp.float32), W).reshape(1, L)
    b2 = jnp.tile(bias.astype(jnp.float32), W).reshape(1, L)

    br = min(_round_up(R, 8), 256)
    Rp = _round_up(R, br)
    if Rp != R:
        x2 = jnp.pad(x2, ((0, Rp - R), (0, 0)))

    out = pl.pallas_call(
        _bn_relu_kernel,
        out_shape=jax.ShapeDtypeStruct((Rp, L), jnp.bfloat16),
        grid_spec=pltpu.PrefetchScalarGridSpec(
            num_scalar_prefetch=0,
            grid=(Rp // br,),
            in_specs=[
                pl.BlockSpec((br, L), lambda r: (r, 0)),
                pl.BlockSpec((1, L), lambda r: (0, 0)),
                pl.BlockSpec((1, L), lambda r: (0, 0)),
            ],
            out_specs=pl.BlockSpec((br, L), lambda r: (r, 0)),
        ),
        compiler_params=pltpu.CompilerParams(dimension_semantics=("parallel",)),
    )(x2, s2, b2)
    return out[:R].reshape(N, H, W, C)


def conv_gemm(lhs2d, w2d, cout, *, bn=None, residual=None, next_bn=None):
    """out = lhs2d @ w2d (+ residual) with optional fused BN+ReLU epilogue(s).

    lhs2d: (M, K) im2col patches; w2d: (K, cout); residual: (M, cout).
    Returns (M, cout) bf16 — and also relu(bn_next(out)) when next_bn is given.
    """
    M, K = lhs2d.shape
    cout_p = _round_up(cout, 128)          # lane-dense output stores
    bm = _pick_bm(M)
    Mp = _round_up(M, bm)

    lhs = lhs2d.astype(jnp.bfloat16)
    if Mp != M:
        lhs = jnp.pad(lhs, ((0, Mp - M), (0, 0)))
    w = w2d.astype(jnp.bfloat16)
    if cout_p != cout:
        w = jnp.pad(w, ((0, 0), (0, cout_p - cout)))

    has_res = residual is not None
    has_bn = bn is not None
    has_next = next_bn is not None

    args = [lhs, w]
    in_specs = [
        pl.BlockSpec((bm, K), lambda m: (m, 0)),
        pl.BlockSpec((K, cout_p), lambda m: (0, 0)),   # constant -> weight stays in VMEM
    ]
    if has_res:
        r = residual.astype(jnp.bfloat16)
        r = jnp.pad(r, ((0, Mp - M), (0, cout_p - cout)))
        args.append(r)
        in_specs.append(pl.BlockSpec((bm, cout_p), lambda m: (m, 0)))
    if has_bn:
        s, b = bn
        args += [_pad_vec(s, cout_p), _pad_vec(b, cout_p)]
        in_specs += [pl.BlockSpec((1, cout_p), lambda m: (0, 0)),
                     pl.BlockSpec((1, cout_p), lambda m: (0, 0))]
    if has_next:
        ns, nb = next_bn
        args += [_pad_vec(ns, cout_p), _pad_vec(nb, cout_p)]
        in_specs += [pl.BlockSpec((1, cout_p), lambda m: (0, 0)),
                     pl.BlockSpec((1, cout_p), lambda m: (0, 0))]

    out_spec = pl.BlockSpec((bm, cout_p), lambda m: (m, 0))
    if has_next:
        out_shape = (jax.ShapeDtypeStruct((Mp, cout_p), jnp.bfloat16),
                     jax.ShapeDtypeStruct((Mp, cout_p), jnp.bfloat16))
        out_specs = (out_spec, pl.BlockSpec((bm, cout_p), lambda m: (m, 0)))
    else:
        out_shape = jax.ShapeDtypeStruct((Mp, cout_p), jnp.bfloat16)
        out_specs = out_spec

    outs = pl.pallas_call(
        _make_gemm_kernel(has_res, has_bn, has_next),
        out_shape=out_shape,
        grid_spec=pltpu.PrefetchScalarGridSpec(
            num_scalar_prefetch=0,
            grid=(Mp // bm,),
            in_specs=in_specs,
            out_specs=out_specs,
        ),
        compiler_params=pltpu.CompilerParams(dimension_semantics=("parallel",)),
    )(*args)

    if has_next:
        out, act = outs
        return out[:M, :cout], act[:M, :cout]
    return outs[:M, :cout]


# ---------------------------------------------------------------------------
# im2col glue (JAX): taps fused along K, batch folded into M
# ---------------------------------------------------------------------------

def _im2col(x, ksize, stride, pad):
    # x: (N, H, W, C) -> (N*Ho*Wo, ksize*ksize*C), rows ordered n-major, (ho, wo) minor.
    N, H, W, C = x.shape
    Ho = (H + 2 * pad - ksize) // stride + 1
    Wo = (W + 2 * pad - ksize) // stride + 1
    if pad > 0:
        x = jnp.pad(x, ((0, 0), (pad, pad), (pad, pad), (0, 0)))
    if ksize == 1 and stride == 1:
        return x.reshape(N * Ho * Wo, C), Ho, Wo
    taps = []
    for kh in range(ksize):
        for kw in range(ksize):
            taps.append(x[:, kh:kh + (Ho - 1) * stride + 1:stride,
                             kw:kw + (Wo - 1) * stride + 1:stride, :])
    patches = jnp.concatenate(taps, axis=-1)        # (N, Ho, Wo, ksize*ksize*C)
    return patches.reshape(N * Ho * Wo, ksize * ksize * C), Ho, Wo


# ---------------------------------------------------------------------------
# BasicBlock / NetworkBlock forward (pre-activation, eval-mode BN, dropRate=0)
# ---------------------------------------------------------------------------

def basic_block_forward(x, x_act, p, *, stride, equal_in_out, out_planes, next_bn):
    # x: raw block input (NHWC, bf16); x_act = relu(bn1(x)) (already computed / fused upstream)
    N, H, W, _ = x_act.shape
    Cout = out_planes

    # conv1 (3x3 / stride) with fused bn2+ReLU epilogue -> h_act
    patches1, Ho, Wo = _im2col(x_act, 3, stride, 1)
    h_act = conv_gemm(patches1, p["w1"], Cout, bn=(p["bn2_scale"], p["bn2_bias"]))
    h_act = h_act.reshape(N, Ho, Wo, Cout)
    # TODO(synk): dropout (dropRate > 0 in training mode) not implemented; dropRate=0.0 -> identity.

    # residual branch
    if equal_in_out:
        res2d = x.reshape(N * Ho * Wo, Cout)                    # raw input (matches PyTorch)
    else:
        psc, _, _ = _im2col(x_act, 1, stride, 0)                # convShortcut(relu(bn1(x)))
        res2d = conv_gemm(psc, p["ws"], Cout)

    # conv2 (3x3 / 1) + residual add, plus fused relu(bn1_next(.)) second output
    patches2, _, _ = _im2col(h_act, 3, 1, 1)
    outs = conv_gemm(patches2, p["w2"], Cout, residual=res2d, next_bn=next_bn)
    if next_bn is None:
        out2d, act2d = outs, None
    else:
        out2d, act2d = outs

    out = out2d.reshape(N, Ho, Wo, Cout)
    out_act = None if act2d is None else act2d.reshape(N, Ho, Wo, Cout)
    return out, out_act


def network_block_forward(x_nchw, params, *, in_planes, out_planes, stride):
    x = jnp.transpose(x_nchw, (0, 2, 3, 1)).astype(jnp.bfloat16)    # NCHW -> NHWC, bf16
    nb = len(params)
    # only the very first bn1+relu needs a standalone pass; the rest are fused into conv2 epilogues
    x_act = bn_relu(x, params[0]["bn1_scale"], params[0]["bn1_bias"])
    for i, p in enumerate(params):
        s = stride if i == 0 else 1
        cin = in_planes if i == 0 else out_planes
        eio = (cin == out_planes)
        nxt = params[i + 1] if i + 1 < nb else None
        next_bn = None if nxt is None else (nxt["bn1_scale"], nxt["bn1_bias"])
        x, x_act = basic_block_forward(x, x_act, p, stride=s, equal_in_out=eio,
                                       out_planes=out_planes, next_bn=next_bn)
    return jnp.transpose(x.astype(jnp.float32), (0, 3, 1, 2))       # NHWC -> NCHW


# ---------------------------------------------------------------------------
# Deterministic parameter init (shapes from the PyTorch module's __init__)
# ---------------------------------------------------------------------------

def _bn_affine(key, c, eps=1e-5):
    k1, k2, k3, k4 = jax.random.split(key, 4)
    gamma = 1.0 + 0.1 * jax.random.normal(k1, (c,), jnp.float32)
    beta = 0.1 * jax.random.normal(k2, (c,), jnp.float32)
    mean = 0.1 * jax.random.normal(k3, (c,), jnp.float32)
    var = jnp.abs(jax.random.normal(k4, (c,), jnp.float32)) + 0.5
    scale = gamma / jnp.sqrt(var + eps)
    bias = beta - mean * scale
    return scale, bias


def _conv_w(key, cin, cout, k):
    # WideResNet conv init: N(0, sqrt(2 / (k*k*cout))); layout (kh, kw, cin) x cout
    std = (2.0 / (k * k * cout)) ** 0.5
    w = std * jax.random.normal(key, (k, k, cin, cout), jnp.float32)
    return w.reshape(k * k * cin, cout)


def init_network_block_params(key, nb_layers, in_planes, out_planes):
    params = []
    for i in range(nb_layers):
        cin = in_planes if i == 0 else out_planes
        key, k1, k2, k3, k4, k5 = jax.random.split(key, 6)
        p = {}
        p["bn1_scale"], p["bn1_bias"] = _bn_affine(k1, cin)
        p["w1"] = _conv_w(k2, cin, out_planes, 3)
        p["bn2_scale"], p["bn2_bias"] = _bn_affine(k3, out_planes)
        p["w2"] = _conv_w(k4, out_planes, out_planes, 3)
        if cin != out_planes:                       # convShortcut only when not equalInOut
            p["ws"] = _conv_w(k5, cin, out_planes, 1)
        params.append(p)
    return params


# ---------------------------------------------------------------------------

if __name__ == "__main__":
    key = jax.random.PRNGKey(0)
    kx, kp = jax.random.split(key)

    N, IN_PLANES, OUT_PLANES, HW = 2, 4, 8, 16
    NB_LAYERS, STRIDE = 2, 2

    x = jax.random.normal(kx, (N, IN_PLANES, HW, HW), jnp.float32)   # NCHW like PyTorch
    params = init_network_block_params(kp, NB_LAYERS, IN_PLANES, OUT_PLANES)

    fwd = jax.jit(lambda xx, pp: network_block_forward(
        xx, pp, in_planes=IN_PLANES, out_planes=OUT_PLANES, stride=STRIDE))

    out = fwd(x, params)
    jax.block_until_ready(out)
    assert out.shape == (N, OUT_PLANES, HW // STRIDE, HW // STRIDE), out.shape
    assert jnp.all(jnp.isfinite(out))
    print("KERNEL_OK")
</pallas_src>

<mosaic_0001>
module attributes {stable_mosaic.version = 11 : i64} {
  func.func @_bn_relu_kernel(%arg0: i32, %arg1: memref<32x64xbf16, #tpu.memory_space<vmem>>, %arg2: memref<1x64xf32, #tpu.memory_space<vmem>>, %arg3: memref<1x64xf32, #tpu.memory_space<vmem>>, %arg4: memref<32x64xbf16, #tpu.memory_space<vmem>>) attributes {dimension_semantics = [#tpu.dimension_semantics<parallel>], iteration_bounds = array<i64: 1>, scalar_prefetch = 0 : i64, scratch_operands = 0 : i64, tpu.core_type = #tpu.core_type<tc>, window_params = [{transform_indices = @transform_0, window_bounds = array<i64: 32, 64>}, {pipeline_mode = #tpu.pipeline_mode<synchronous>, transform_indices = @transform_1, window_bounds = array<i64: 1, 64>}, {pipeline_mode = #tpu.pipeline_mode<synchronous>, transform_indices = @transform_2, window_bounds = array<i64: 1, 64>}, {transform_indices = @transform_3, window_bounds = array<i64: 32, 64>}]} {
    %c0 = arith.constant 0 : index
    %c0_0 = arith.constant 0 : index
    %0 = vector.load %arg1[%c0, %c0_0] : memref<32x64xbf16, #tpu.memory_space<vmem>>, vector<32x64xbf16>
    %1 = arith.extf %0 : vector<32x64xbf16> to vector<32x64xf32>
    %c0_1 = arith.constant 0 : index
    %c0_2 = arith.constant 0 : index
    %2 = vector.load %arg2[%c0_1, %c0_2] : memref<1x64xf32, #tpu.memory_space<vmem>>, vector<1x64xf32>
    %3 = vector.broadcast %2 : vector<1x64xf32> to vector<32x64xf32>
    %4 = arith.mulf %1, %3 : vector<32x64xf32>
    %c0_3 = arith.constant 0 : index
    %c0_4 = arith.constant 0 : index
    %5 = vector.load %arg3[%c0_3, %c0_4] : memref<1x64xf32, #tpu.memory_space<vmem>>, vector<1x64xf32>
    %6 = vector.broadcast %5 : vector<1x64xf32> to vector<32x64xf32>
    %7 = arith.addf %4, %6 : vector<32x64xf32>
    %cst = arith.constant 0.000000e+00 : f32
    %8 = vector.broadcast %cst : f32 to vector<32x64xf32>
    %9 = arith.maximumf %7, %8 : vector<32x64xf32>
    %10 = arith.truncf %9 : vector<32x64xf32> to vector<32x64xbf16>
    %c0_5 = arith.constant 0 : index
    %c0_6 = arith.constant 0 : index
    %11 = vector.load %arg4[%c0_5, %c0_6] : memref<32x64xbf16, #tpu.memory_space<vmem>>, vector<32x64xbf16>
    tpu.vector_store %arg4[%c0_5, %c0_6], %10 {strides = array<i32>} : memref<32x64xbf16, #tpu.memory_space<vmem>>, vector<32x64xbf16>,
    return
  }
  func.func @transform_0(%arg0: i32) -> (i32, i32) {
    %c0_i32 = arith.constant 0 : i32
    %c0_i32_0 = arith.constant 0 : i32
    return %arg0, %c0_i32 : i32, i32
  }
  func.func @transform_1(%arg0: i32) -> (i32, i32) {
    %c0_i32 = arith.constant 0 : i32
    %c0_i32_0 = arith.constant 0 : i32
    %c0_i32_1 = arith.constant 0 : i32
    return %c0_i32, %c0_i32_0 : i32, i32
  }
  func.func @transform_2(%arg0: i32) -> (i32, i32) {
    %c0_i32 = arith.constant 0 : i32
    %c0_i32_0 = arith.constant 0 : i32
    %c0_i32_1 = arith.constant 0 : i32
    return %c0_i32, %c0_i32_0 : i32, i32
  }
  func.func @transform_3(%arg0: i32) -> (i32, i32) {
    %c0_i32 = arith.constant 0 : i32
    %c0_i32_0 = arith.constant 0 : i32
    return %arg0, %c0_i32 : i32, i32
  }
}

module attributes {stable_mosaic.version = 11 : i64} {
  func.func @kernel(%arg0: i32, %arg1: memref<64x36xbf16, #tpu.memory_space<vmem>>, %arg2: memref<36x128xbf16, #tpu.memory_space<vmem>>, %arg3: memref<1x128xf32, #tpu.memory_space<vmem>>, %arg4: memref<1x128xf32, #tpu.memory_space<vmem>>, %arg5: memref<64x128xbf16, #tpu.memory_space<vmem>>) attributes {dimension_semantics = [#tpu.dimension_semantics<parallel>], iteration_bounds = array<i64: 2>, scalar_prefetch = 0 : i64, scratch_operands = 0 : i64, tpu.core_type = #tpu.core_type<tc>, window_params = [{transform_indices = @transform_0, window_bounds = array<i64: 64, 36>}, {pipeline_mode = #tpu.pipeline_mode<synchronous>, transform_indices = @transform_1, window_bounds = array<i64: 36, 128>}, {pipeline_mode = #tpu.pipeline_mode<synchronous>, transform_indices = @transform_2, window_bounds = array<i64: 1, 128>}, {pipeline_mode = #tpu.pipeline_mode<synchronous>, transform_indices = @transform_3, window_bounds = array<i64: 1, 128>}, {transform_indices = @transform_4, window_bounds = array<i64: 64, 128>}]} {
    %c0 = arith.constant 0 : index
    %c0_0 = arith.constant 0 : index
    %0 = vector.load %arg1[%c0, %c0_0] : memref<64x36xbf16, #tpu.memory_space<vmem>>, vector<64x36xbf16>
    %c0_1 = arith.constant 0 : index
    %c0_2 = arith.constant 0 : index
    %1 = vector.load %arg2[%c0_1, %c0_2] : memref<36x128xbf16, #tpu.memory_space<vmem>>, vector<36x128xbf16>
    %cst = arith.constant dense<0.000000e+00> : vector<64x128xf32>
    %2 = tpu.matmul %0, %1, %cst {dimension_numbers = #tpu.dot_dimension_numbers<[1], [0], [0], [1], [0, 0, 1, 1], [], []>} : vector<64x36xbf16>, vector<36x128xbf16>, vector<64x128xf32> -> vector<64x128xf32>
    %c0_3 = arith.constant 0 : index
    %c0_4 = arith.constant 0 : index
    %3 = vector.load %arg3[%c0_3, %c0_4] : memref<1x128xf32, #tpu.memory_space<vmem>>, vector<1x128xf32>
    %4 = vector.broadcast %3 : vector<1x128xf32> to vector<64x128xf32>
    %5 = arith.mulf %2, %4 : vector<64x128xf32>
    %c0_5 = arith.constant 0 : index
    %c0_6 = arith.constant 0 : index
    %6 = vector.load %arg4[%c0_5, %c0_6] : memref<1x128xf32, #tpu.memory_space<vmem>>, vector<1x128xf32>
    %7 = vector.broadcast %6 : vector<1x128xf32> to vector<64x128xf32>
    %8 = arith.addf %5, %7 : vector<64x128xf32>
    %cst_7 = arith.constant 0.000000e+00 : f32
    %9 = vector.broadcast %cst_7 : f32 to vector<64x128xf32>
    %10 = arith.maximumf %8, %9 : vector<64x128xf32>
    %11 = arith.truncf %10 : vector<64x128xf32> to vector<64x128xbf16>
    %c0_8 = arith.constant 0 : index
    %c0_9 = arith.constant 0 : index
    %12 = vector.load %arg5[%c0_8, %c0_9] : memref<64x128xbf16, #tpu.memory_space<vmem>>, vector<64x128xbf16>
    tpu.vector_store %arg5[%c0_8, %c0_9], %11 {strides = array<i32>} : memref<64x128xbf16, #tpu.memory_space<vmem>>, vector<64x128xbf16>,
    return
  }
  func.func @transform_0(%arg0: i32) -> (i32, i32) {
    %c0_i32 = arith.constant 0 : i32
    %c0_i32_0 = arith.constant 0 : i32
    return %arg0, %c0_i32 : i32, i32
  }
  func.func @transform_1(%arg0: i32) -> (i32, i32) {
    %c0_i32 = arith.constant 0 : i32
    %c0_i32_0 = arith.constant 0 : i32
    %c0_i32_1 = arith.constant 0 : i32
    return %c0_i32, %c0_i32_0 : i32, i32
  }
  func.func @transform_2(%arg0: i32) -> (i32, i32) {
    %c0_i32 = arith.constant 0 : i32
    %c0_i32_0 = arith.constant 0 : i32
    %c0_i32_1 = arith.constant 0 : i32
    return %c0_i32, %c0_i32_0 : i32, i32
  }
  func.func @transform_3(%arg0: i32) -> (i32, i32) {
    %c0_i32 = arith.constant 0 : i32
    %c0_i32_0 = arith.constant 0 : i32
    %c0_i32_1 = arith.constant 0 : i32
    return %c0_i32, %c0_i32_0 : i32, i32
  }
  func.func @transform_4(%arg0: i32) -> (i32, i32) {
    %c0_i32 = arith.constant 0 : i32
    %c0_i32_0 = arith.constant 0 : i32
    return %arg0, %c0_i32 : i32, i32
  }
}

module attributes {stable_mosaic.version = 11 : i64} {
  func.func @kernel(%arg0: i32, %arg1: memref<64x4xbf16, #tpu.memory_space<vmem>>, %arg2: memref<4x128xbf16, #tpu.memory_space<vmem>>, %arg3: memref<64x128xbf16, #tpu.memory_space<vmem>>) attributes {dimension_semantics = [#tpu.dimension_semantics<parallel>], iteration_bounds = array<i64: 2>, scalar_prefetch = 0 : i64, scratch_operands = 0 : i64, tpu.core_type = #tpu.core_type<tc>, window_params = [{transform_indices = @transform_0, window_bounds = array<i64: 64, 4>}, {pipeline_mode = #tpu.pipeline_mode<synchronous>, transform_indices = @transform_1, window_bounds = array<i64: 4, 128>}, {transform_indices = @transform_2, window_bounds = array<i64: 64, 128>}]} {
    %c0 = arith.constant 0 : index
    %c0_0 = arith.constant 0 : index
    %0 = vector.load %arg1[%c0, %c0_0] : memref<64x4xbf16, #tpu.memory_space<vmem>>, vector<64x4xbf16>
    %c0_1 = arith.constant 0 : index
    %c0_2 = arith.constant 0 : index
    %1 = vector.load %arg2[%c0_1, %c0_2] : memref<4x128xbf16, #tpu.memory_space<vmem>>, vector<4x128xbf16>
    %cst = arith.constant dense<0.000000e+00> : vector<64x128xf32>
    %2 = tpu.matmul %0, %1, %cst {dimension_numbers = #tpu.dot_dimension_numbers<[1], [0], [0], [1], [0, 0, 1, 1], [], []>} : vector<64x4xbf16>, vector<4x128xbf16>, vector<64x128xf32> -> vector<64x128xf32>
    %3 = arith.truncf %2 : vector<64x128xf32> to vector<64x128xbf16>
    %c0_3 = arith.constant 0 : index
    %c0_4 = arith.constant 0 : index
    %4 = vector.load %arg3[%c0_3, %c0_4] : memref<64x128xbf16, #tpu.memory_space<vmem>>, vector<64x128xbf16>
    tpu.vector_store %arg3[%c0_3, %c0_4], %3 {strides = array<i32>} : memref<64x128xbf16, #tpu.memory_space<vmem>>, vector<64x128xbf16>,
    return
  }
  func.func @transform_0(%arg0: i32) -> (i32, i32) {
    %c0_i32 = arith.constant 0 : i32
    %c0_i32_0 = arith.constant 0 : i32
    return %arg0, %c0_i32 : i32, i32
  }
  func.func @transform_1(%arg0: i32) -> (i32, i32) {
    %c0_i32 = arith.constant 0 : i32
    %c0_i32_0 = arith.constant 0 : i32
    %c0_i32_1 = arith.constant 0 : i32
    return %c0_i32, %c0_i32_0 : i32, i32
  }
  func.func @transform_2(%arg0: i32) -> (i32, i32) {
    %c0_i32 = arith.constant 0 : i32
    %c0_i32_0 = arith.constant 0 : i32
    return %arg0, %c0_i32 : i32, i32
  }
}

module attributes {stable_mosaic.version = 11 : i64} {
  func.func @kernel(%arg0: i32, %arg1: memref<64x72xbf16, #tpu.memory_space<vmem>>, %arg2: memref<72x128xbf16, #tpu.memory_space<vmem>>, %arg3: memref<1x128xf32, #tpu.memory_space<vmem>>, %arg4: memref<1x128xf32, #tpu.memory_space<vmem>>, %arg5: memref<64x128xbf16, #tpu.memory_space<vmem>>) attributes {dimension_semantics = [#tpu.dimension_semantics<parallel>], iteration_bounds = array<i64: 2>, scalar_prefetch = 0 : i64, scratch_operands = 0 : i64, tpu.core_type = #tpu.core_type<tc>, window_params = [{transform_indices = @transform_0, window_bounds = array<i64: 64, 72>}, {pipeline_mode = #tpu.pipeline_mode<synchronous>, transform_indices = @transform_1, window_bounds = array<i64: 72, 128>}, {pipeline_mode = #tpu.pipeline_mode<synchronous>, transform_indices = @transform_2, window_bounds = array<i64: 1, 128>}, {pipeline_mode = #tpu.pipeline_mode<synchronous>, transform_indices = @transform_3, window_bounds = array<i64: 1, 128>}, {transform_indices = @transform_4, window_bounds = array<i64: 64, 128>}]} {
    %c0 = arith.constant 0 : index
    %c0_0 = arith.constant 0 : index
    %0 = vector.load %arg1[%c0, %c0_0] : memref<64x72xbf16, #tpu.memory_space<vmem>>, vector<64x72xbf16>
    %c0_1 = arith.constant 0 : index
    %c0_2 = arith.constant 0 : index
    %1 = vector.load %arg2[%c0_1, %c0_2] : memref<72x128xbf16, #tpu.memory_space<vmem>>, vector<72x128xbf16>
    %cst = arith.constant dense<0.000000e+00> : vector<64x128xf32>
    %2 = tpu.matmul %0, %1, %cst {dimension_numbers = #tpu.dot_dimension_numbers<[1], [0], [0], [1], [0, 0, 1, 1], [], []>} : vector<64x72xbf16>, vector<72x128xbf16>, vector<64x128xf32> -> vector<64x128xf32>
    %c0_3 = arith.constant 0 : index
    %c0_4 = arith.constant 0 : index
    %3 = vector.load %arg3[%c0_3, %c0_4] : memref<1x128xf32, #tpu.memory_space<vmem>>, vector<1x128xf32>
    %4 = vector.broadcast %3 : vector<1x128xf32> to vector<64x128xf32>
    %5 = arith.mulf %2, %4 : vector<64x128xf32>
    %c0_5 = arith.constant 0 : index
    %c0_6 = arith.constant 0 : index
    %6 = vector.load %arg4[%c0_5, %c0_6] : memref<1x128xf32, #tpu.memory_space<vmem>>, vector<1x128xf32>
    %7 = vector.broadcast %6 : vector<1x128xf32> to vector<64x128xf32>
    %8 = arith.addf %5, %7 : vector<64x128xf32>
    %cst_7 = arith.constant 0.000000e+00 : f32
    %9 = vector.broadcast %cst_7 : f32 to vector<64x128xf32>
    %10 = arith.maximumf %8, %9 : vector<64x128xf32>
    %11 = arith.truncf %10 : vector<64x128xf32> to vector<64x128xbf16>
    %c0_8 = arith.constant 0 : index
    %c0_9 = arith.constant 0 : index
    %12 = vector.load %arg5[%c0_8, %c0_9] : memref<64x128xbf16, #tpu.memory_space<vmem>>, vector<64x128xbf16>
    tpu.vector_store %arg5[%c0_8, %c0_9], %11 {strides = array<i32>} : memref<64x128xbf16, #tpu.memory_space<vmem>>, vector<64x128xbf16>,
    return
  }
  func.func @transform_0(%arg0: i32) -> (i32, i32) {
    %c0_i32 = arith.constant 0 : i32
    %c0_i32_0 = arith.constant 0 : i32
    return %arg0, %c0_i32 : i32, i32
  }
  func.func @transform_1(%arg0: i32) -> (i32, i32) {
    %c0_i32 = arith.constant 0 : i32
    %c0_i32_0 = arith.constant 0 : i32
    %c0_i32_1 = arith.constant 0 : i32
    return %c0_i32, %c0_i32_0 : i32, i32
  }
  func.func @transform_2(%arg0: i32) -> (i32, i32) {
    %c0_i32 = arith.constant 0 : i32
    %c0_i32_0 = arith.constant 0 : i32
    %c0_i32_1 = arith.constant 0 : i32
    return %c0_i32, %c0_i32_0 : i32, i32
  }
  func.func @transform_3(%arg0: i32) -> (i32, i32) {
    %c0_i32 = arith.constant 0 : i32
    %c0_i32_0 = arith.constant 0 : i32
    %c0_i32_1 = arith.constant 0 : i32
    return %c0_i32, %c0_i32_0 : i32, i32
  }
  func.func @transform_4(%arg0: i32) -> (i32, i32) {
    %c0_i32 = arith.constant 0 : i32
    %c0_i32_0 = arith.constant 0 : i32
    return %arg0, %c0_i32 : i32, i32
  }
}

module attributes {stable_mosaic.version = 11 : i64} {
  func.func @kernel(%arg0: i32, %arg1: memref<64x72xbf16, #tpu.memory_space<vmem>>, %arg2: memref<72x128xbf16, #tpu.memory_space<vmem>>, %arg3: memref<64x128xbf16, #tpu.memory_space<vmem>>, %arg4: memref<64x128xbf16, #tpu.memory_space<vmem>>) attributes {dimension_semantics = [#tpu.dimension_semantics<parallel>], iteration_bounds = array<i64: 2>, scalar_prefetch = 0 : i64, scratch_operands = 0 : i64, tpu.core_type = #tpu.core_type<tc>, window_params = [{transform_indices = @transform_0, window_bounds = array<i64: 64, 72>}, {pipeline_mode = #tpu.pipeline_mode<synchronous>, transform_indices = @transform_1, window_bounds = array<i64: 72, 128>}, {transform_indices = @transform_2, window_bounds = array<i64: 64, 128>}, {transform_indices = @transform_3, window_bounds = array<i64: 64, 128>}]} {
    %c0 = arith.constant 0 : index
    %c0_0 = arith.constant 0 : index
    %0 = vector.load %arg1[%c0, %c0_0] : memref<64x72xbf16, #tpu.memory_space<vmem>>, vector<64x72xbf16>
    %c0_1 = arith.constant 0 : index
    %c0_2 = arith.constant 0 : index
    %1 = vector.load %arg2[%c0_1, %c0_2] : memref<72x128xbf16, #tpu.memory_space<vmem>>, vector<72x128xbf16>
    %cst = arith.constant dense<0.000000e+00> : vector<64x128xf32>
    %2 = tpu.matmul %0, %1, %cst {dimension_numbers = #tpu.dot_dimension_numbers<[1], [0], [0], [1], [0, 0, 1, 1], [], []>} : vector<64x72xbf16>, vector<72x128xbf16>, vector<64x128xf32> -> vector<64x128xf32>
    %c0_3 = arith.constant 0 : index
    %c0_4 = arith.constant 0 : index
    %3 = vector.load %arg3[%c0_3, %c0_4] : memref<64x128xbf16, #tpu.memory_space<vmem>>, vector<64x128xbf16>
    %4 = arith.extf %3 : vector<64x128xbf16> to vector<64x128xf32>
    %5 = arith.addf %2, %4 : vector<64x128xf32>
    %6 = arith.truncf %5 : vector<64x128xf32> to vector<64x128xbf16>
    %c0_5 = arith.constant 0 : index
    %c0_6 = arith.constant 0 : index
    %7 = vector.load %arg4[%c0_5, %c0_6] : memref<64x128xbf16, #tpu.memory_space<vmem>>, vector<64x128xbf16>
    tpu.vector_store %arg4[%c0_5, %c0_6], %6 {strides = array<i32>} : memref<64x128xbf16, #tpu.memory_space<vmem>>, vector<64x128xbf16>,
    return
  }
  func.func @transform_0(%arg0: i32) -> (i32, i32) {
    %c0_i32 = arith.constant 0 : i32
    %c0_i32_0 = arith.constant 0 : i32
    return %arg0, %c0_i32 : i32, i32
  }
  func.func @transform_1(%arg0: i32) -> (i32, i32) {
    %c0_i32 = arith.constant 0 : i32
    %c0_i32_0 = arith.constant 0 : i32
    %c0_i32_1 = arith.constant 0 : i32
    return %c0_i32, %c0_i32_0 : i32, i32
  }
  func.func @transform_2(%arg0: i32) -> (i32, i32) {
    %c0_i32 = arith.constant 0 : i32
    %c0_i32_0 = arith.constant 0 : i32
    return %arg0, %c0_i32 : i32, i32
  }
  func.func @transform_3(%arg0: i32) -> (i32, i32) {
    %c0_i32 = arith.constant 0 : i32
    %c0_i32_0 = arith.constant 0 : i32
    return %arg0, %c0_i32 : i32, i32
  }
}

module attributes {stable_mosaic.version = 11 : i64} {
  func.func @kernel(%arg0: i32, %arg1: memref<64x72xbf16, #tpu.memory_space<vmem>>, %arg2: memref<72x128xbf16, #tpu.memory_space<vmem>>, %arg3: memref<64x128xbf16, #tpu.memory_space<vmem>>, %arg4: memref<1x128xf32, #tpu.memory_space<vmem>>, %arg5: memref<1x128xf32, #tpu.memory_space<vmem>>, %arg6: memref<64x128xbf16, #tpu.memory_space<vmem>>, %arg7: memref<64x128xbf16, #tpu.memory_space<vmem>>) attributes {dimension_semantics = [#tpu.dimension_semantics<parallel>], iteration_bounds = array<i64: 2>, scalar_prefetch = 0 : i64, scratch_operands = 0 : i64, tpu.core_type = #tpu.core_type<tc>, window_params = [{transform_indices = @transform_0, window_bounds = array<i64: 64, 72>}, {pipeline_mode = #tpu.pipeline_mode<synchronous>, transform_indices = @transform_1, window_bounds = array<i64: 72, 128>}, {transform_indices = @transform_2, window_bounds = array<i64: 64, 128>}, {pipeline_mode = #tpu.pipeline_mode<synchronous>, transform_indices = @transform_3, window_bounds = array<i64: 1, 128>}, {pipeline_mode = #tpu.pipeline_mode<synchronous>, transform_indices = @transform_4, window_bounds = array<i64: 1, 128>}, {transform_indices = @transform_5, window_bounds = array<i64: 64, 128>}, {transform_indices = @transform_6, window_bounds = array<i64: 64, 128>}]} {
    %c0 = arith.constant 0 : index
    %c0_0 = arith.constant 0 : index
    %0 = vector.load %arg1[%c0, %c0_0] : memref<64x72xbf16, #tpu.memory_space<vmem>>, vector<64x72xbf16>
    %c0_1 = arith.constant 0 : index
    %c0_2 = arith.constant 0 : index
    %1 = vector.load %arg2[%c0_1, %c0_2] : memref<72x128xbf16, #tpu.memory_space<vmem>>, vector<72x128xbf16>
    %cst = arith.constant dense<0.000000e+00> : vector<64x128xf32>
    %2 = tpu.matmul %0, %1, %cst {dimension_numbers = #tpu.dot_dimension_numbers<[1], [0], [0], [1], [0, 0, 1, 1], [], []>} : vector<64x72xbf16>, vector<72x128xbf16>, vector<64x128xf32> -> vector<64x128xf32>
    %c0_3 = arith.constant 0 : index
    %c0_4 = arith.constant 0 : index
    %3 = vector.load %arg3[%c0_3, %c0_4] : memref<64x128xbf16, #tpu.memory_space<vmem>>, vector<64x128xbf16>
    %4 = arith.extf %3 : vector<64x128xbf16> to vector<64x128xf32>
    %5 = arith.addf %2, %4 : vector<64x128xf32>
    %6 = arith.truncf %5 : vector<64x128xf32> to vector<64x128xbf16>
    %c0_5 = arith.constant 0 : index
    %c0_6 = arith.constant 0 : index
    %7 = vector.load %arg6[%c0_5, %c0_6] : memref<64x128xbf16, #tpu.memory_space<vmem>>, vector<64x128xbf16>
    tpu.vector_store %arg6[%c0_5, %c0_6], %6 {strides = array<i32>} : memref<64x128xbf16, #tpu.memory_space<vmem>>, vector<64x128xbf16>,
    %c0_7 = arith.constant 0 : index
    %c0_8 = arith.constant 0 : index
    %8 = vector.load %arg4[%c0_7, %c0_8] : memref<1x128xf32, #tpu.memory_space<vmem>>, vector<1x128xf32>
    %9 = vector.broadcast %8 : vector<1x128xf32> to vector<64x128xf32>
    %10 = arith.mulf %5, %9 : vector<64x128xf32>
    %c0_9 = arith.constant 0 : index
    %c0_10 = arith.constant 0 : index
    %11 = vector.load %arg5[%c0_9, %c0_10] : memref<1x128xf32, #tpu.memory_space<vmem>>, vector<1x128xf32>
    %12 = vector.broadcast %11 : vector<1x128xf32> to vector<64x128xf32>
    %13 = arith.addf %10, %12 : vector<64x128xf32>
    %cst_11 = arith.constant 0.000000e+00 : f32
    %14 = vector.broadcast %cst_11 : f32 to vector<64x128xf32>
    %15 = arith.maximumf %13, %14 : vector<64x128xf32>
    %16 = arith.truncf %15 : vector<64x128xf32> to vector<64x128xbf16>
    %c0_12 = arith.constant 0 : index
    %c0_13 = arith.constant 0 : index
    %17 = vector.load %arg7[%c0_12, %c0_13] : memref<64x128xbf16, #tpu.memory_space<vmem>>, vector<64x128xbf16>
    tpu.vector_store %arg7[%c0_12, %c0_13], %16 {strides = array<i32>} : memref<64x128xbf16, #tpu.memory_space<vmem>>, vector<64x128xbf16>,
    return
  }
  func.func @transform_0(%arg0: i32) -> (i32, i32) {
    %c0_i32 = arith.constant 0 : i32
    %c0_i32_0 = arith.constant 0 : i32
    return %arg0, %c0_i32 : i32, i32
  }
  func.func @transform_1(%arg0: i32) -> (i32, i32) {
    %c0_i32 = arith.constant 0 : i32
    %c0_i32_0 = arith.constant 0 : i32
    %c0_i32_1 = arith.constant 0 : i32
    return %c0_i32, %c0_i32_0 : i32, i32
  }
  func.func @transform_2(%arg0: i32) -> (i32, i32) {
    %c0_i32 = arith.constant 0 : i32
    %c0_i32_0 = arith.constant 0 : i32
    return %arg0, %c0_i32 : i32, i32
  }
  func.func @transform_3(%arg0: i32) -> (i32, i32) {
    %c0_i32 = arith.constant 0 : i32
    %c0_i32_0 = arith.constant 0 : i32
    %c0_i32_1 = arith.constant 0 : i32
    return %c0_i32, %c0_i32_0 : i32, i32
  }
  func.func @transform_4(%arg0: i32) -> (i32, i32) {
    %c0_i32 = arith.constant 0 : i32
    %c0_i32_0 = arith.constant 0 : i32
    %c0_i32_1 = arith.constant 0 : i32
    return %c0_i32, %c0_i32_0 : i32, i32
  }
  func.func @transform_5(%arg0: i32) -> (i32, i32) {
    %c0_i32 = arith.constant 0 : i32
    %c0_i32_0 = arith.constant 0 : i32
    return %arg0, %c0_i32 : i32, i32
  }
  func.func @transform_6(%arg0: i32) -> (i32, i32) {
    %c0_i32 = arith.constant 0 : i32
    %c0_i32_0 = arith.constant 0 : i32
    return %arg0, %c0_i32 : i32, i32
  }
}

</mosaic_0001>

<llo_original>
// kernel: tile.14
$region0: #{tile.14}
  %s0 = inlined_call_operand.vmem [shape: f32[16,4], index: 0, kind: input, shape index: {}]
  %s1 = inlined_call_operand.vmem [shape: f32[1,64], index: 1, kind: output, shape index: {}]
  $region1: #{tile.14} parent=0
    #allocation0 [shape = 'u8[4096]{0}', space=vmem, size = 0x1000, scoped, tag = 'scoped mem for output reshape']
    %v2 = vld [vmem:[%s0] sm:$0x1]
    %vm3 = vcmask 31744
    %4 = vst.msk [vmem:[#allocation0] sm:$0x1] %vm3, %v2
    %s5 = scalar_lea.vmem %s0, 15
    %v6 = vld [vmem:[%s5] sm:$0x1]
    %7 = vrot.lane.b32.xlu0 %v6, 60
    %v8 = vpop.permute.xlu0 %7
    %vm9 = vcmask 523744
    %10 = vst.msk [vmem:[#allocation0] sm:$0x1] %vm9, %v8
    %s11 = scalar_lea.vmem %s0, 14
    %v12 = vld [vmem:[%s11] sm:$0x1]
    %13 = vrot.lane.b32.xlu0 %v12, 56
    %v14 = vpop.permute.xlu0 %13
    %vm15 = vcmask 490944
    %16 = vst.msk [vmem:[#allocation0] sm:$0x1] %vm15, %v14
    %s17 = scalar_lea.vmem %s0, 13
    %v18 = vld [vmem:[%s17] sm:$0x1]
    %19 = vrot.lane.b32.xlu0 %v18, 52
    %v20 = vpop.permute.xlu0 %19
    %vm21 = vcmask 458144
    %22 = vst.msk [vmem:[#allocation0] sm:$0x1] %vm21, %v20
    %s23 = scalar_lea.vmem %s0, 12
    %v24 = vld [vmem:[%s23] sm:$0x1]
    %25 = vrot.lane.b32.xlu0 %v24, 48
    %v26 = vpop.permute.xlu0 %25
    %vm27 = vcmask 425344
    %28 = vst.msk [vmem:[#allocation0] sm:$0x1] %vm27, %v26
    %s29 = scalar_lea.vmem %s0, 11
    %v30 = vld [vmem:[%s29] sm:$0x1]
    %31 = vrot.lane.b32.xlu0 %v30, 44
    %v32 = vpop.permute.xlu0 %31
    %vm33 = vcmask 392544
    %34 = vst.msk [vmem:[#allocation0] sm:$0x1] %vm33, %v32
    %s35 = scalar_lea.vmem %s0, 10
    %v36 = vld [vmem:[%s35] sm:$0x1]
    %37 = vrot.lane.b32.xlu0 %v36, 40
    %v38 = vpop.permute.xlu0 %37
    %vm39 = vcmask 359744
    %40 = vst.msk [vmem:[#allocation0] sm:$0x1] %vm39, %v38
    %s41 = scalar_lea.vmem %s0, 9
    %v42 = vld [vmem:[%s41] sm:$0x1]
    %43 = vrot.lane.b32.xlu0 %v42, 36
    %v44 = vpop.permute.xlu0 %43
    %vm45 = vcmask 326944
    %46 = vst.msk [vmem:[#allocation0] sm:$0x1] %vm45, %v44
    %s47 = scalar_lea.vmem %s0, 8
    %v48 = vld [vmem:[%s47] sm:$0x1]
    %49 = vrot.lane.b32.xlu0 %v48, 32
    %v50 = vpop.permute.xlu0 %49
    %vm51 = vcmask 294144
    %52 = vst.msk [vmem:[#allocation0] sm:$0x1] %vm51, %v50
    %s53 = scalar_lea.vmem %s0, 7
    %v54 = vld [vmem:[%s53] sm:$0x1]
    %55 = vrot.lane.b32.xlu0 %v54, 28
    %v56 = vpop.permute.xlu0 %55
    %vm57 = vcmask 261344
    %58 = vst.msk [vmem:[#allocation0] sm:$0x1] %vm57, %v56
    %s59 = scalar_lea.vmem %s0, 6
    %v60 = vld [vmem:[%s59] sm:$0x1]
    %61 = vrot.lane.b32.xlu0 %v60, 24
    %v62 = vpop.permute.xlu0 %61
    %vm63 = vcmask 228544
    %64 = vst.msk [vmem:[#allocation0] sm:$0x1] %vm63, %v62
    %s65 = scalar_lea.vmem %s0, 5
    %v66 = vld [vmem:[%s65] sm:$0x1]
    %67 = vrot.lane.b32.xlu0 %v66, 20
    %v68 = vpop.permute.xlu0 %67
    %vm69 = vcmask 195744
    %70 = vst.msk [vmem:[#allocation0] sm:$0x1] %vm69, %v68
    %s71 = scalar_lea.vmem %s0, 4
    %v72 = vld [vmem:[%s71] sm:$0x1]
    %73 = vrot.lane.b32.xlu0 %v72, 16
    %v74 = vpop.permute.xlu0 %73
    %vm75 = vcmask 162944
    %76 = vst.msk [vmem:[#allocation0] sm:$0x1] %vm75, %v74
    %s77 = scalar_lea.vmem %s0, 3
    %v78 = vld [vmem:[%s77] sm:$0x1]
    %79 = vrot.lane.b32.xlu0 %v78, 12
    %v80 = vpop.permute.xlu0 %79
    %vm81 = vcmask 130144
    %82 = vst.msk [vmem:[#allocation0] sm:$0x1] %vm81, %v80
    %s83 = scalar_lea.vmem %s0, 2
    %v84 = vld [vmem:[%s83] sm:$0x1]
    %85 = vrot.lane.b32.xlu0 %v84, 8
    %v86 = vpop.permute.xlu0 %85
    %vm87 = vcmask 97344
    %88 = vst.msk [vmem:[#allocation0] sm:$0x1] %vm87, %v86
    %s89 = scalar_lea.vmem %s0, 1
    %v90 = vld [vmem:[%s89] sm:$0x1]
    %91 = vrot.lane.b32.xlu0 %v90, 4
    %v92 = vpop.permute.xlu0 %91
    %vm93 = vcmask 64544
    %94 = vst.msk [vmem:[#allocation0] sm:$0x1] %vm93, %v92
    %s96 = sshllo.u32 0, 1
    %v98 = vld [vmem:[#allocation0] sm:%s96]
    %s99 = sshllo.u32 0, 1
    %100 = vst [vmem:[%s1] sm:%s99] %v98

// kernel: tile.13
$region0: #{tile.13}
  #allocation0 [shape = 's32[1]{0}', space=sflag, size = 0x4, scoped, tag = 'scoped memory for tile.13']
  %s0 = inlined_call_operand.vmem [shape: f32[4], index: 0, kind: input, shape index: {}]
  %s1 = inlined_call_operand.vmem [shape: f32[16,4], index: 1, kind: output, shape index: {}]
  // Predicated region
  $region2: #{tile.13} parent=0 // pred_check
    _
  $region3: #{tile.13} parent=0 // pred_check_branch
    %3 = sbr.rel (0) target = $region5
  $region4: #{tile.13} parent=0 // pred_region
    _
  $region5: #{tile.13} parent=0 // pred_fallthru
    _
  %v4 = vld [vmem:[%s0] ss:$0 sm:$0xff]
  %5 = vst [vmem:[%s1] sm:$0xff] %v4
  %s6 = scalar_lea.vmem %s1, 8
  %7 = vst [vmem:[%s6] sm:$0xff] %v4

// kernel: _lambda_.6
$region0: #{_lambda_.6}
  #allocation0 [shape = 'u32[]', space=smem, size = 0x4, offset = 0x4, fixed_abs, tag = 'smem constant byte address 0x4 - core index']
  #allocation1 [shape = 'u32[144,128]{1,0:T(1,128)}', space=vmem, size = 0x12000, scoped, tag = 'internal scratch']
  %s0 = inlined_call_operand.vmem [shape: bf16[32,64], index: 0, kind: input, shape index: {}]
  %s1 = inlined_call_operand.vmem [shape: f32[1,64], index: 1, kind: input, shape index: {}]
  %s2 = inlined_call_operand.vmem [shape: f32[1,64], index: 2, kind: input, shape index: {}]
  %s3 = inlined_call_operand.vmem [shape: bf16[32,64], index: 3, kind: output, shape index: {}]
  %s4 = sld [smem:[#allocation0]]
  $region22: #{_lambda_.6} parent=0
    _
  %s6 = ssub.s32 1, %s4
  %s7 = scalar_select 0, %s6, %s4
  // Predicated region
  $region2: #{_lambda_.6} parent=0 // pred_check
    _
  $region3: #{_lambda_.6} parent=0 // pred_check_branch
    %9 = sbr.rel (0) target = $region5
  $region4: #{_lambda_.6} parent=0 // pred_region
    _
  $region5: #{_lambda_.6} parent=0 // pred_fallthru
    _
  // Predicated region
  $region6: #{_lambda_.6} parent=0 // pred_check
    _
  $region7: #{_lambda_.6} parent=0 // pred_check_branch
    %11 = sbr.rel (0) target = $region9
  $region8: #{_lambda_.6} parent=0 // pred_region
    _
  $region9: #{_lambda_.6} parent=0 // pred_fallthru
    _
  // Predicated region
  $region10: #{_lambda_.6} parent=0 // pred_check
    _
  $region11: #{_lambda_.6} parent=0 // pred_check_branch
    %13 = sbr.rel (0) target = $region13
  $region12: #{_lambda_.6} parent=0 // pred_region
    _
  $region13: #{_lambda_.6} parent=0 // pred_fallthru
    _
  %v14 = vld [vmem:[%s0] sm:$0xf]
  %v15 = vld [vmem:[%s0 + $0x4] sm:$0xf]
  %v16 = vld [vmem:[%s0 + $0x8] sm:$0xf]
  %v17 = vld [vmem:[%s0 + $0xc] sm:$0xf]
  %v18 = vunpack.c.l.bf16 %v14
  %v19 = vunpack.c.l.bf16 %v15
  %v20 = vunpack.c.l.bf16 %v16
  %v21 = vunpack.c.l.bf16 %v17
  %v22 = vld [vmem:[%s1] sm:$0x1]
  %v24 = vlaneseq
  %v25 = vshrl.u32 %v24, 7
  %v26 = vsub.s32 0, %v25
  %v27 = vrot.slane %v22, %v26
  %v29 = vmul.f32 %v18, %v27
  %v30 = vmul.f32 %v19, %v27
  %v31 = vmul.f32 %v20, %v27
  %v32 = vmul.f32 %v21, %v27
  %v33 = vld [vmem:[%s2] sm:$0x1]
  %v35 = vlaneseq
  %v36 = vshrl.u32 %v35, 7
  %v37 = vsub.s32 0, %v36
  %v38 = vrot.slane %v33, %v37
  %v40 = vadd.f32 %v29, %v38
  %v41 = vadd.f32 %v30, %v38
  %v42 = vadd.f32 %v31, %v38
  %v43 = vadd.f32 %v32, %v38
  %v44 = vmax.f32 %v40, 0.0
  %v45 = vmax.f32 %v41, 0.0
  %v46 = vmax.f32 %v42, 0.0
  %v47 = vmax.f32 %v43, 0.0
  %v48 = vpack.c.bf16 %v45, %v44
  %v49 = vpack.c.bf16 %v47, %v46
  %v52 = vunpack.c.l.b16 %v48
  %v53 = vunpack.c.h.b16 %v48
  %v54 = vunpack.c.l.b16 %v49
  %v55 = vunpack.c.h.b16 %v49
  %v56 = vpack.c.b16 %v52, %v52
  %v57 = vpack.c.b16 %v53, %v53
  %v58 = vpack.c.b16 %v54, %v54
  %v59 = vpack.c.b16 %v55, %v55
  %vm64 = vcmask 519168
  %65 = vst.msk [vmem:[%s3] sm:$0xf] %vm64, %v56
  %66 = vst.msk [vmem:[%s3 + $0x4] sm:$0xf] %vm64, %v57
  %67 = vst.msk [vmem:[%s3 + $0x8] sm:$0xf] %vm64, %v58
  %68 = vst.msk [vmem:[%s3 + $0xc] sm:$0xf] %vm64, %v59
  // Predicated region
  $region14: #{_lambda_.6} parent=0 // pred_check
    _
  $region15: #{_lambda_.6} parent=0 // pred_check_branch
    %70 = sbr.rel (0) target = $region17
  $region16: #{_lambda_.6} parent=0 // pred_region
    _
  $region17: #{_lambda_.6} parent=0 // pred_fallthru
    _
  // Predicated region
  $region18: #{_lambda_.6} parent=0 // pred_check
    _
  $region19: #{_lambda_.6} parent=0 // pred_check_branch
    %72 = sbr.rel (0) target = $region21
  $region20: #{_lambda_.6} parent=0 // pred_region
    _
  $region21: #{_lambda_.6} parent=0 // pred_fallthru
    _

// kernel: _lambda_.7
$region0: #{_lambda_.7}
  #allocation0 [shape = 'u32[]', space=smem, size = 0x4, offset = 0x4, fixed_abs, tag = 'smem constant byte address 0x4 - core index']
  #allocation1 [shape = 'u32[144,128]{1,0:T(1,128)}', space=vmem, size = 0x12000, scoped, tag = 'internal scratch']
  %s0 = inlined_call_operand.vmem [shape: bf16[128,36], index: 0, kind: input, shape index: {}]
  %s1 = inlined_call_operand.vmem [shape: bf16[36,128], index: 1, kind: input, shape index: {}]
  %s2 = inlined_call_operand.vmem [shape: f32[1,128], index: 2, kind: input, shape index: {}]
  %s3 = inlined_call_operand.vmem [shape: f32[1,128], index: 3, kind: input, shape index: {}]
  %s4 = inlined_call_operand.vmem [shape: bf16[128,128], index: 4, kind: output, shape index: {}]
  %s5 = sld [smem:[#allocation0]]
  $region49: #{_lambda_.7} parent=0
    _
  %s7 = ssub.s32 1, %s5
  %s8 = scalar_select 0, %s7, %s5
  loop: start=0, step=1, limit=4
  $region2: #{_lambda_.7} parent=0 // loop_pre_header
    _
  $region3: #{_lambda_.7} parent=0 // loop_header
    %s10 = sphi 0, %s14
    %p11 = scmp.ge.s32.totalorder %s10, 4
    %s20 = sphi 0, %s22
    %s23 = sphi 0, %s20
    %s24 = sphi 0, %s23
    %s40 = sphi 0, %s24
    %s44 = sphi 0, %s44
    %s46 = sphi 0, %s44
    %s47 = sphi 0, %s46
    %s61 = sphi 0, %s47
    %s65 = sphi 0, %s65
    %s67 = sphi 0, %s65
    %s68 = sphi 0, %s67
    %s82 = sphi 0, %s68
    %s86 = sphi 0, %s86
    %s88 = sphi 0, %s86
    %s89 = sphi 0, %s88
    %s103 = sphi 0, %s89
    %s109 = sphi 0, %s111
    %s112 = sphi 0, %s109
    %s113 = sphi 0, %s112
    %s129 = sphi 0, %s113
  $region4: #{_lambda_.7} parent=0 // loop_header_branch
    %13 = sbr.rel (%p11) target = $region8
  $region5: #{_lambda_.7} parent=0 // loop_body
    %s15 = ssub.s32 %s10, 1
    %s16 = ssub.s32 %s10, 2
    %s17 = sadd.s32 %s10, 1
    %s18 = ssub.s32 %s10, %s17
    %p19 = scmp.eq.s32.totalorder %s18, 0
    %s21 = sadd.s32 %s20, 1
    %s22 = scalar_select %p19, %s20, %s21
    %p25 = pneg %p19
    %p26 = scmp.eq.s32.totalorder %s10, 1
    %p27 = por %p25, %p26
    %p28 = scmp.ne.s32.totalorder %s20, %s23
    %p29 = scmp.eq.s32.totalorder %s10, 0
    %p30 = por %p28, %p29
    %p31 = scmp.ne.s32.totalorder %s20, %s23
    %p32 = scmp.eq.s32.totalorder %s15, 1
    %p33 = por %p31, %p32
    %p34 = scmp.ne.s32.totalorder %s23, %s24
    %p35 = scmp.eq.s32.totalorder %s15, 0
    %p36 = por %p34, %p35
    %p37 = scmp.ne.s32.totalorder %s23, %s24
    %p38 = scmp.eq.s32.totalorder %s16, 1
    %p39 = por %p37, %p38
    %p41 = scmp.ne.s32.totalorder %s24, %s40
    %p42 = scmp.eq.s32.totalorder %s16, 0
    %p43 = por %p41, %p42
    %s45 = sadd.s32 %s44, 1
    %p48 = scmp.eq.s32.totalorder %s10, 1
    %p49 = scmp.ne.s32.totalorder %s44, %s46
    %p50 = scmp.eq.s32.totalorder %s10, 0
    %p51 = por %p49, %p50
    %p52 = scmp.ne.s32.totalorder %s44, %s46
    %p53 = scmp.eq.s32.totalorder %s15, 1
    %p54 = por %p52, %p53
    %p55 = scmp.ne.s32.totalorder %s46, %s47
    %p56 = scmp.eq.s32.totalorder %s15, 0
    %p57 = por %p55, %p56
    %p58 = scmp.ne.s32.totalorder %s46, %s47
    %p59 = scmp.eq.s32.totalorder %s16, 1
    %p60 = por %p58, %p59
    %p62 = scmp.ne.s32.totalorder %s47, %s61
    %p63 = scmp.eq.s32.totalorder %s16, 0
    %p64 = por %p62, %p63
    %s66 = sadd.s32 %s65, 1
    %p69 = scmp.eq.s32.totalorder %s10, 1
    %p70 = scmp.ne.s32.totalorder %s65, %s67
    %p71 = scmp.eq.s32.totalorder %s10, 0
    %p72 = por %p70, %p71
    %p73 = scmp.ne.s32.totalorder %s65, %s67
    %p74 = scmp.eq.s32.totalorder %s15, 1
    %p75 = por %p73, %p74
    %p76 = scmp.ne.s32.totalorder %s67, %s68
    %p77 = scmp.eq.s32.totalorder %s15, 0
    %p78 = por %p76, %p77
    %p79 = scmp.ne.s32.totalorder %s67, %s68
    %p80 = scmp.eq.s32.totalorder %s16, 1
    %p81 = por %p79, %p80
    %p83 = scmp.ne.s32.totalorder %s68, %s82
    %p84 = scmp.eq.s32.totalorder %s16, 0
    %p85 = por %p83, %p84
    %s87 = sadd.s32 %s86, 1
    %p90 = scmp.eq.s32.totalorder %s10, 1
    %p91 = scmp.ne.s32.totalorder %s86, %s88
    %p92 = scmp.eq.s32.totalorder %s10, 0
    %p93 = por %p91, %p92
    %p94 = scmp.ne.s32.totalorder %s86, %s88
    %p95 = scmp.eq.s32.totalorder %s15, 1
    %p96 = por %p94, %p95
    %p97 = scmp.ne.s32.totalorder %s88, %s89
    %p98 = scmp.eq.s32.totalorder %s15, 0
    %p99 = por %p97, %p98
    %p100 = scmp.ne.s32.totalorder %s88, %s89
    %p101 = scmp.eq.s32.totalorder %s16, 1
    %p102 = por %p100, %p101
    %p104 = scmp.ne.s32.totalorder %s89, %s103
    %p105 = scmp.eq.s32.totalorder %s16, 0
    %p106 = por %p104, %p105
    %s107 = ssub.s32 %s10, %s17
    %p108 = scmp.eq.s32.totalorder %s107, 0
    %s110 = sadd.s32 %s109, 1
    %s111 = scalar_select %p108, %s109, %s110
    %p114 = pneg %p108
    %p115 = scmp.eq.s32.totalorder %s10, 1
    %p116 = por %p114, %p115
    %p117 = scmp.ne.s32.totalorder %s109, %s112
    %p118 = scmp.eq.s32.totalorder %s10, 0
    %p119 = por %p117, %p118
    %p120 = scmp.ne.s32.totalorder %s109, %s112
    %p121 = scmp.eq.s32.totalorder %s15, 1
    %p122 = por %p120, %p121
    %p123 = scmp.ne.s32.totalorder %s112, %s113
    %p124 = scmp.eq.s32.totalorder %s15, 0
    %p125 = por %p123, %p124
    %p126 = scmp.ne.s32.totalorder %s112, %s113
    %p127 = scmp.eq.s32.totalorder %s16, 1
    %p128 = por %p126, %p127
    %p130 = scmp.ne.s32.totalorder %s113, %s129
    %p131 = scmp.eq.s32.totalorder %s16, 0
    %p132 = por %p130, %p131
    %p133 = scmp.le.s32.totalorder 1, %s10
    %p134 = scmp.lt.s32.totalorder %s10, 3
    %p135 = pnand %p133, %p134
    %p136 = pneg %p135
    // Predicated region
    $region9: #{_lambda_.7} parent=5 // pred_check
      _
    $region10: #{_lambda_.7} parent=5 // pred_check_branch
      %138 = sbr.rel (%p135) target = $region12
    $region11: #{_lambda_.7} parent=5 // pred_region
      %s139 = ssub.s32 %s10, 1
      // Predicated region
      $region13: #{_lambda_.7} parent=11 // pred_check
        %p140 = pneg %p57
      $region14: #{_lambda_.7} parent=11 // pred_check_branch
        %142 = sbr.rel (%p140) target = $region16
      $region15: #{_lambda_.7} parent=11 // pred_region
        _
      $region16: #{_lambda_.7} parent=11 // pred_fallthru
        _
      // Predicated region
      $region17: #{_lambda_.7} parent=11 // pred_check
        %p143 = pneg %p78
      $region18: #{_lambda_.7} parent=11 // pred_check_branch
        %145 = sbr.rel (%p143) target = $region20
      $region19: #{_lambda_.7} parent=11 // pred_region
        _
      $region20: #{_lambda_.7} parent=11 // pred_fallthru
        _
      // Predicated region
      $region21: #{_lambda_.7} parent=11 // pred_check
        %p146 = pneg %p99
      $region22: #{_lambda_.7} parent=11 // pred_check_branch
        %148 = sbr.rel (%p146) target = $region24
      $region23: #{_lambda_.7} parent=11 // pred_region
        _
      $region24: #{_lambda_.7} parent=11 // pred_fallthru
        _
    $region12: #{_lambda_.7} parent=5 // pred_fallthru
      _
    %p149 = scmp.lt.s32.totalorder %s10, 2
    // Predicated region
    $region25: #{_lambda_.7} parent=5 // pred_check
      %p150 = pneg %p149
    $region26: #{_lambda_.7} parent=5 // pred_check_branch
      %152 = sbr.rel (%p150) target = $region28
    $region27: #{_lambda_.7} parent=5 // pred_region
      // Predicated region
      $region29: #{_lambda_.7} parent=27 // pred_check
        %p153 = pneg %p30
      $region30: #{_lambda_.7} parent=27 // pred_check_branch
        %155 = sbr.rel (%p153) target = $region32
      $region31: #{_lambda_.7} parent=27 // pred_region
        %s156 = smul.u32 8, %s10
        %p157 = scmp.lt.s32.totalorder %s156, 15
        %s158 = scalar_select %p157, %s156, 15
        %s159 = smul.addr %s158, 4
        %s160 = scalar_lea.vmem %s0, %s159
        %s161 = smul.u32 8, %s10
      $region32: #{_lambda_.7} parent=27 // pred_fallthru
        _
    $region28: #{_lambda_.7} parent=5 // pred_fallthru
      _
    %p162 = scmp.le.s32.totalorder 1, %s10
    %p163 = scmp.lt.s32.totalorder %s10, 3
    %p164 = pnand %p162, %p163
    %p165 = pneg %p164
    // Predicated region
    $region33: #{_lambda_.7} parent=5 // pred_check
      _
    $region34: #{_lambda_.7} parent=5 // pred_check_branch
      %167 = sbr.rel (%p164) target = $region36
    $region35: #{_lambda_.7} parent=5 // pred_region
      %s168 = ssub.s32 %s10, 1
      %s169 = smul.u32 8, %s15
      %p170 = scmp.lt.s32.totalorder %s169, 15
      %s171 = scalar_select %p170, %s169, 15
      %s172 = smul.addr %s171, 4
      %s173 = scalar_lea.vmem %s0, %s172
      %p174 = pneg %p36
      %p175 = pneg %p33
      %p176 = pneg %p57
      %p177 = pneg %p54
      %p178 = pneg %p78
      %p179 = pneg %p75
      %p180 = pneg %p99
      %p181 = pneg %p96
      %p182 = pneg %p125
      %p183 = pneg %p122
      %s184 = smul.u32 8, %s15
      %p185 = scmp.lt.s32.totalorder %s184, 15
      %s186 = scalar_select %p185, %s184, 15
      %s187 = smul.addr %s186, 4
      %s188 = scalar_lea.vmem %s4, %s187
      %s189 = smul.u32 8, %s15
      %p190 = scmp.lt.s32.totalorder %s189, 15
      %s191 = scalar_select %p190, %s189, 15
      %s192 = smul.addr %s191, 4
      %s193 = scalar_lea.vmem %s0, %s192
      %s194 = smul.u32 8, %s15
      %s195 = smul.u32 8, %s15
      %p196 = scmp.lt.s32.totalorder %s195, 15
      %s197 = scalar_select %p196, %s195, 15
      %s198 = smul.addr %s197, 4
      %s199 = scalar_lea.vmem %s4, %s198
      %s200 = smul.u32 8, %s15
      %v202 = vld [vmem:[%s193] sm:$0xf]
      %v203 = vld [vmem:[%s193 + $0x4] sm:$0xf]
      %v204 = vld [vmem:[%s193 + $0x8] sm:$0xf]
      %v205 = vld [vmem:[%s193 + $0xc] sm:$0xf]
      %v206 = vld [vmem:[%s193 + $0x10] sm:$0xf]
      %v207 = vld [vmem:[%s193 + $0x14] sm:$0xf]
      %v208 = vld [vmem:[%s193 + $0x18] sm:$0xf]
      %v209 = vld [vmem:[%s193 + $0x1c] sm:$0xf]
      %v210 = vld [vmem:[%s1] sm:$0xf]
      %v211 = vld [vmem:[%s1 + $0x4] sm:$0xf]
      %v212 = vld [vmem:[%s1 + $0x8] sm:$0xf]
      %v213 = vld [vmem:[%s1 + $0xc] sm:$0xf]
      %v214 = vld [vmem:[%s1 + $0x10] sm:$0x3]
      %v223 = vunpack.c.l.b16 %v202
      %v224 = vunpack.c.l.b16 %v203
      %v225 = vunpack.c.l.b16 %v204
      %v226 = vunpack.c.l.b16 %v205
      %v227 = vunpack.c.l.b16 %v206
      %v228 = vunpack.c.l.b16 %v207
      %v229 = vunpack.c.l.b16 %v208
      %v230 = vunpack.c.l.b16 %v209
      %v231 = vpack.c.b16 %v224, %v223
      %v232 = vpack.c.b16 %v226, %v225
      %v233 = vpack.c.b16 %v228, %v227
      %v234 = vpack.c.b16 %v230, %v229
      %v240 = vunpack.c.l.b16 %v210
      %v241 = vunpack.c.l.b16 %v211
      %v242 = vunpack.c.l.b16 %v212
      %v243 = vunpack.c.l.b16 %v213
      %v244 = vunpack.c.l.b16 %v214
      %v245 = vpack.c.b16 %v241, %v240
      %v246 = vpack.c.b16 %v243, %v242
      %v247 = vpack.c.b16 %v244, %v244
      %vm250 = vcmask 293888
      %v252 = vsel %vm250, %v231, 0
      %v255 = vsel %vm250, %v232, 0
      %v258 = vsel %vm250, %v233, 0
      %v261 = vsel %vm250, %v234, 0
      %vm263 = vcmask 1041408
      %v265 = vsel %vm263, %v247, 0
      %267 = vmatprep.subr.bf16.mxu0 0
      %268 = vmatpush1.bf16.msra.mxu0 %v245
      %269 = vmatprep.subr.bf16.mxu0 0
      %270 = vmatpush1.bf16.msra.mxu0 %v246
      %271 = vmatprep.subr.bf16.mxu0 0
      %272 = vmatpush1.bf16.msra.mxu0 %v265
      %273 = vmatprep.subr.bf16.mxu0 0
      %274 = vmatpush1.bf16.msra.mxu0 0
      %275 = vmatprep.subr.bf16.mxu0 0
      %276 = vmatpush1.bf16.msra.mxu0 0
      %277 = vmatprep.subr.bf16.mxu0 0
      %278 = vmatpush1.bf16.msra.mxu0 0
      %279 = vmatprep.subr.bf16.mxu0 0
      %280 = vmatpush1.bf16.msra.mxu0 0
      %281 = vmatprep.subr.bf16.mxu0 0
      %282 = vmatpush1.bf16.msra.mxu0 0
      %283 = vmatprep.subr.bf16.mxu0 0
      %284 = vmatpush1.bf16.msra.mxu0 0
      %285 = vmatprep.subr.bf16.mxu0 0
      %286 = vmatpush1.bf16.msra.mxu0 0
      %287 = vmatprep.subr.bf16.mxu0 0
      %288 = vmatpush1.bf16.msra.mxu0 0
      %289 = vmatprep.subr.bf16.mxu0 0
      %290 = vmatpush1.bf16.msra.mxu0 0
      %291 = vmatprep.subr.bf16.mxu0 0
      %292 = vmatpush1.bf16.msra.mxu0 0
      %293 = vmatprep.subr.bf16.mxu0 0
      %294 = vmatpush1.bf16.msra.mxu0 0
      %295 = vmatprep.subr.bf16.mxu0 0
      %296 = vmatpush1.bf16.msra.mxu0 0
      %297 = vmatprep.subr.bf16.mxu0 0
      %298 = vmatpush1.bf16.msra.mxu0 0
      %299 = vmatprep.mubr.bf16.mxu0 0
      %300 = vmatmul.mubr.bf16.gmra.mrb[0].mxu0 %v252
      %v301 = vpop.f32.mrb[0].mxu0
      %v302 = vadd.f32 0.0, %v301
      %v303 = vpop.f32.mrb[0].mxu0
      %v304 = vpop.f32.mrb[0].mxu0
      %v305 = vadd.f32 0.0, %v304
      %v306 = vpop.f32.mrb[0].mxu0
      %307 = vmatprep.mubr.bf16.mxu0 0
      %308 = vmatmul.mubr.bf16.gmra.mrb[0].mxu0 %v255
      %v309 = vpop.f32.mrb[0].mxu0
      %v310 = vadd.f32 0.0, %v309
      %v311 = vpop.f32.mrb[0].mxu0
      %v312 = vpop.f32.mrb[0].mxu0
      %v313 = vadd.f32 0.0, %v312
      %v314 = vpop.f32.mrb[0].mxu0
      %315 = vmatprep.mubr.bf16.mxu0 0
      %316 = vmatmul.mubr.bf16.gmra.mrb[0].mxu0 %v258
      %v317 = vpop.f32.mrb[0].mxu0
      %v318 = vadd.f32 0.0, %v317
      %v319 = vpop.f32.mrb[0].mxu0
      %v320 = vpop.f32.mrb[0].mxu0
      %v321 = vadd.f32 0.0, %v320
      %v322 = vpop.f32.mrb[0].mxu0
      %323 = vmatprep.mubr.bf16.mxu0 0
      %324 = vmatmul.mubr.bf16.gmra.mrb[0].mxu0 %v261
      %v325 = vpop.f32.mrb[0].mxu0
      %v326 = vadd.f32 0.0, %v325
      %v327 = vpop.f32.mrb[0].mxu0
      %v328 = vpop.f32.mrb[0].mxu0
      %v329 = vadd.f32 0.0, %v328
      %v330 = vpop.f32.mrb[0].mxu0
      %331 = vdwg.mxu0
      %v332 = vld [vmem:[%s2] sm:$0x1]
      %v334 = vlaneseq
      %v335 = vshrl.u32 %v334, 7
      %v336 = vsub.s32 0, %v335
      %v337 = vrot.slane %v332, %v336
      %v339 = vmul.f32 %v302, %v337
      %v340 = vmul.f32 %v305, %v337
      %v341 = vmul.f32 %v310, %v337
      %v342 = vmul.f32 %v313, %v337
      %v343 = vmul.f32 %v318, %v337
      %v344 = vmul.f32 %v321, %v337
      %v345 = vmul.f32 %v326, %v337
      %v346 = vmul.f32 %v329, %v337
      %v347 = vld [vmem:[%s3] sm:$0x1]
      %v349 = vlaneseq
      %v350 = vshrl.u32 %v349, 7
      %v351 = vsub.s32 0, %v350
      %v352 = vrot.slane %v347, %v351
      %v354 = vadd.f32 %v339, %v352
      %v355 = vadd.f32 %v340, %v352
      %v356 = vadd.f32 %v341, %v352
      %v357 = vadd.f32 %v342, %v352
      %v358 = vadd.f32 %v343, %v352
      %v359 = vadd.f32 %v344, %v352
      %v360 = vadd.f32 %v345, %v352
      %v361 = vadd.f32 %v346, %v352
      %v362 = vmax.f32 %v354, 0.0
      %v363 = vmax.f32 %v355, 0.0
      %v364 = vmax.f32 %v356, 0.0
      %v365 = vmax.f32 %v357, 0.0
      %v366 = vmax.f32 %v358, 0.0
      %v367 = vmax.f32 %v359, 0.0
      %v368 = vmax.f32 %v360, 0.0
      %v369 = vmax.f32 %v361, 0.0
      %v370 = vpack.c.bf16 %v363, %v362
      %v371 = vpack.c.bf16 %v365, %v364
      %v372 = vpack.c.bf16 %v367, %v366
      %v373 = vpack.c.bf16 %v369, %v368
      %v378 = vunpack.c.l.b16 %v370
      %v379 = vunpack.c.h.b16 %v370
      %v380 = vunpack.c.l.b16 %v371
      %v381 = vunpack.c.h.b16 %v371
      %v382 = vunpack.c.l.b16 %v372
      %v383 = vunpack.c.h.b16 %v372
      %v384 = vunpack.c.l.b16 %v373
      %v385 = vunpack.c.h.b16 %v373
      %v386 = vpack.c.b16 %v378, %v378
      %v387 = vpack.c.b16 %v379, %v379
      %v388 = vpack.c.b16 %v380, %v380
      %v389 = vpack.c.b16 %v381, %v381
      %v390 = vpack.c.b16 %v382, %v382
      %v391 = vpack.c.b16 %v383, %v383
      %v392 = vpack.c.b16 %v384, %v384
      %v393 = vpack.c.b16 %v385, %v385
      %402 = vst [vmem:[%s199] sm:$0xf] %v386
      %403 = vst [vmem:[%s199 + $0x4] sm:$0xf] %v387
      %404 = vst [vmem:[%s199 + $0x8] sm:$0xf] %v388
      %405 = vst [vmem:[%s199 + $0xc] sm:$0xf] %v389
      %406 = vst [vmem:[%s199 + $0x10] sm:$0xf] %v390
      %407 = vst [vmem:[%s199 + $0x14] sm:$0xf] %v391
      %408 = vst [vmem:[%s199 + $0x18] sm:$0xf] %v392
      %409 = vst [vmem:[%s199 + $0x1c] sm:$0xf] %v393
      %s410 = smul.u32 8, %s15
      %p411 = scmp.lt.s32.totalorder %s410, 15
      %s412 = scalar_select %p411, %s410, 15
      %s413 = smul.addr %s412, 4
      %s414 = scalar_lea.vmem %s4, %s413
      // Predicated region
      $region37: #{_lambda_.7} parent=35 // pred_check
        %p415 = pneg %p122
      $region38: #{_lambda_.7} parent=35 // pred_check_branch
        %417 = sbr.rel (%p415) target = $region40
      $region39: #{_lambda_.7} parent=35 // pred_region
        %s418 = smul.u32 8, %s15
      $region40: #{_lambda_.7} parent=35 // pred_fallthru
        _
    $region36: #{_lambda_.7} parent=5 // pred_fallthru
      _
    %p419 = scmp.le.s32.totalorder 2, %s10
    // Predicated region
    $region41: #{_lambda_.7} parent=5 // pred_check
      %p420 = pneg %p419
    $region42: #{_lambda_.7} parent=5 // pred_check_branch
      %422 = sbr.rel (%p420) target = $region44
    $region43: #{_lambda_.7} parent=5 // pred_region
      %s423 = ssub.s32 %s10, 2
      // Predicated region
      $region45: #{_lambda_.7} parent=43 // pred_check
        %p424 = pneg %p128
      $region46: #{_lambda_.7} parent=43 // pred_check_branch
        %426 = sbr.rel (%p424) target = $region48
      $region47: #{_lambda_.7} parent=43 // pred_region
        %s427 = smul.u32 8, %s16
        %p428 = scmp.lt.s32.totalorder %s427, 15
        %s429 = scalar_select %p428, %s427, 15
        %s430 = smul.addr %s429, 4
        %s431 = scalar_lea.vmem %s4, %s430
      $region48: #{_lambda_.7} parent=43 // pred_fallthru
        _
    $region44: #{_lambda_.7} parent=5 // pred_fallthru
      _
  $region6: #{_lambda_.7} parent=0 // loop_footer
    %s14 = sadd.s32 1, %s10
  $region7: #{_lambda_.7} parent=0 // loop_footer_branch
    %9 = sbr.rel target = $region3
  $region8: #{_lambda_.7} parent=0 // loop_exit
    _

// kernel: _lambda_.8
$region0: #{_lambda_.8}
  #allocation0 [shape = 'u32[]', space=smem, size = 0x4, offset = 0x4, fixed_abs, tag = 'smem constant byte address 0x4 - core index']
  #allocation1 [shape = 'u32[144,128]{1,0:T(1,128)}', space=vmem, size = 0x12000, scoped, tag = 'internal scratch']
  %s0 = inlined_call_operand.vmem [shape: bf16[128,4], index: 0, kind: input, shape index: {}]
  %s1 = inlined_call_operand.vmem [shape: bf16[4,128], index: 1, kind: input, shape index: {}]
  %s2 = inlined_call_operand.vmem [shape: bf16[128,128], index: 2, kind: output, shape index: {}]
  %s3 = sld [smem:[#allocation0]]
  $region41: #{_lambda_.8} parent=0
    _
  %s5 = ssub.s32 1, %s3
  %s6 = scalar_select 0, %s5, %s3
  loop: start=0, step=1, limit=4
  $region2: #{_lambda_.8} parent=0 // loop_pre_header
    _
  $region3: #{_lambda_.8} parent=0 // loop_header
    %s8 = sphi 0, %s12
    %p9 = scmp.ge.s32.totalorder %s8, 4
    %s18 = sphi 0, %s20
    %s21 = sphi 0, %s18
    %s22 = sphi 0, %s21
    %s38 = sphi 0, %s22
    %s42 = sphi 0, %s42
    %s44 = sphi 0, %s42
    %s45 = sphi 0, %s44
    %s59 = sphi 0, %s45
    %s65 = sphi 0, %s67
    %s68 = sphi 0, %s65
    %s69 = sphi 0, %s68
    %s85 = sphi 0, %s69
  $region4: #{_lambda_.8} parent=0 // loop_header_branch
    %11 = sbr.rel (%p9) target = $region8
  $region5: #{_lambda_.8} parent=0 // loop_body
    %s13 = ssub.s32 %s8, 1
    %s14 = ssub.s32 %s8, 2
    %s15 = sadd.s32 %s8, 1
    %s16 = ssub.s32 %s8, %s15
    %p17 = scmp.eq.s32.totalorder %s16, 0
    %s19 = sadd.s32 %s18, 1
    %s20 = scalar_select %p17, %s18, %s19
    %p23 = pneg %p17
    %p24 = scmp.eq.s32.totalorder %s8, 1
    %p25 = por %p23, %p24
    %p26 = scmp.ne.s32.totalorder %s18, %s21
    %p27 = scmp.eq.s32.totalorder %s8, 0
    %p28 = por %p26, %p27
    %p29 = scmp.ne.s32.totalorder %s18, %s21
    %p30 = scmp.eq.s32.totalorder %s13, 1
    %p31 = por %p29, %p30
    %p32 = scmp.ne.s32.totalorder %s21, %s22
    %p33 = scmp.eq.s32.totalorder %s13, 0
    %p34 = por %p32, %p33
    %p35 = scmp.ne.s32.totalorder %s21, %s22
    %p36 = scmp.eq.s32.totalorder %s14, 1
    %p37 = por %p35, %p36
    %p39 = scmp.ne.s32.totalorder %s22, %s38
    %p40 = scmp.eq.s32.totalorder %s14, 0
    %p41 = por %p39, %p40
    %s43 = sadd.s32 %s42, 1
    %p46 = scmp.eq.s32.totalorder %s8, 1
    %p47 = scmp.ne.s32.totalorder %s42, %s44
    %p48 = scmp.eq.s32.totalorder %s8, 0
    %p49 = por %p47, %p48
    %p50 = scmp.ne.s32.totalorder %s42, %s44
    %p51 = scmp.eq.s32.totalorder %s13, 1
    %p52 = por %p50, %p51
    %p53 = scmp.ne.s32.totalorder %s44, %s45
    %p54 = scmp.eq.s32.totalorder %s13, 0
    %p55 = por %p53, %p54
    %p56 = scmp.ne.s32.totalorder %s44, %s45
    %p57 = scmp.eq.s32.totalorder %s14, 1
    %p58 = por %p56, %p57
    %p60 = scmp.ne.s32.totalorder %s45, %s59
    %p61 = scmp.eq.s32.totalorder %s14, 0
    %p62 = por %p60, %p61
    %s63 = ssub.s32 %s8, %s15
    %p64 = scmp.eq.s32.totalorder %s63, 0
    %s66 = sadd.s32 %s65, 1
    %s67 = scalar_select %p64, %s65, %s66
    %p70 = pneg %p64
    %p71 = scmp.eq.s32.totalorder %s8, 1
    %p72 = por %p70, %p71
    %p73 = scmp.ne.s32.totalorder %s65, %s68
    %p74 = scmp.eq.s32.totalorder %s8, 0
    %p75 = por %p73, %p74
    %p76 = scmp.ne.s32.totalorder %s65, %s68
    %p77 = scmp.eq.s32.totalorder %s13, 1
    %p78 = por %p76, %p77
    %p79 = scmp.ne.s32.totalorder %s68, %s69
    %p80 = scmp.eq.s32.totalorder %s13, 0
    %p81 = por %p79, %p80
    %p82 = scmp.ne.s32.totalorder %s68, %s69
    %p83 = scmp.eq.s32.totalorder %s14, 1
    %p84 = por %p82, %p83
    %p86 = scmp.ne.s32.totalorder %s69, %s85
    %p87 = scmp.eq.s32.totalorder %s14, 0
    %p88 = por %p86, %p87
    %p89 = scmp.le.s32.totalorder 1, %s8
    %p90 = scmp.lt.s32.totalorder %s8, 3
    %p91 = pnand %p89, %p90
    %p92 = pneg %p91
    // Predicated region
    $region9: #{_lambda_.8} parent=5 // pred_check
      _
    $region10: #{_lambda_.8} parent=5 // pred_check_branch
      %94 = sbr.rel (%p91) target = $region12
    $region11: #{_lambda_.8} parent=5 // pred_region
      %s95 = ssub.s32 %s8, 1
      // Predicated region
      $region13: #{_lambda_.8} parent=11 // pred_check
        %p96 = pneg %p55
      $region14: #{_lambda_.8} parent=11 // pred_check_branch
        %98 = sbr.rel (%p96) target = $region16
      $region15: #{_lambda_.8} parent=11 // pred_region
        _
      $region16: #{_lambda_.8} parent=11 // pred_fallthru
        _
    $region12: #{_lambda_.8} parent=5 // pred_fallthru
      _
    %p99 = scmp.lt.s32.totalorder %s8, 2
    // Predicated region
    $region17: #{_lambda_.8} parent=5 // pred_check
      %p100 = pneg %p99
    $region18: #{_lambda_.8} parent=5 // pred_check_branch
      %102 = sbr.rel (%p100) target = $region20
    $region19: #{_lambda_.8} parent=5 // pred_region
      // Predicated region
      $region21: #{_lambda_.8} parent=19 // pred_check
        %p103 = pneg %p28
      $region22: #{_lambda_.8} parent=19 // pred_check_branch
        %105 = sbr.rel (%p103) target = $region24
      $region23: #{_lambda_.8} parent=19 // pred_region
        %s106 = smul.u32 8, %s8
        %p107 = scmp.lt.s32.totalorder %s106, 15
        %s108 = scalar_select %p107, %s106, 15
        %s109 = smul.addr %s108, 4
        %s110 = scalar_lea.vmem %s0, %s109
        %s111 = smul.u32 8, %s8
      $region24: #{_lambda_.8} parent=19 // pred_fallthru
        _
    $region20: #{_lambda_.8} parent=5 // pred_fallthru
      _
    %p112 = scmp.le.s32.totalorder 1, %s8
    %p113 = scmp.lt.s32.totalorder %s8, 3
    %p114 = pnand %p112, %p113
    %p115 = pneg %p114
    // Predicated region
    $region25: #{_lambda_.8} parent=5 // pred_check
      _
    $region26: #{_lambda_.8} parent=5 // pred_check_branch
      %117 = sbr.rel (%p114) target = $region28
    $region27: #{_lambda_.8} parent=5 // pred_region
      %s118 = ssub.s32 %s8, 1
      %s119 = smul.u32 8, %s13
      %p120 = scmp.lt.s32.totalorder %s119, 15
      %s121 = scalar_select %p120, %s119, 15
      %s122 = smul.addr %s121, 4
      %s123 = scalar_lea.vmem %s0, %s122
      %p124 = pneg %p34
      %p125 = pneg %p31
      %p126 = pneg %p55
      %p127 = pneg %p52
      %p128 = pneg %p81
      %p129 = pneg %p78
      %s130 = smul.u32 8, %s13
      %p131 = scmp.lt.s32.totalorder %s130, 15
      %s132 = scalar_select %p131, %s130, 15
      %s133 = smul.addr %s132, 4
      %s134 = scalar_lea.vmem %s2, %s133
      %s135 = smul.u32 8, %s13
      %p136 = scmp.lt.s32.totalorder %s135, 15
      %s137 = scalar_select %p136, %s135, 15
      %s138 = smul.addr %s137, 4
      %s139 = scalar_lea.vmem %s0, %s138
      %s140 = smul.u32 8, %s13
      %s141 = smul.u32 8, %s13
      %p142 = scmp.lt.s32.totalorder %s141, 15
      %s143 = scalar_select %p142, %s141, 15
      %s144 = smul.addr %s143, 4
      %s145 = scalar_lea.vmem %s2, %s144
      %s146 = smul.u32 8, %s13
      %v148 = vld [vmem:[%s139] sm:$0xf]
      %v149 = vld [vmem:[%s139 + $0x4] sm:$0xf]
      %v150 = vld [vmem:[%s139 + $0x8] sm:$0xf]
      %v151 = vld [vmem:[%s139 + $0xc] sm:$0xf]
      %v152 = vld [vmem:[%s139 + $0x10] sm:$0xf]
      %v153 = vld [vmem:[%s139 + $0x14] sm:$0xf]
      %v154 = vld [vmem:[%s139 + $0x18] sm:$0xf]
      %v155 = vld [vmem:[%s139 + $0x1c] sm:$0xf]
      %v156 = vld [vmem:[%s1] sm:$0x3]
      %v165 = vunpack.c.l.b16 %v148
      %v166 = vunpack.c.l.b16 %v149
      %v167 = vunpack.c.l.b16 %v150
      %v168 = vunpack.c.l.b16 %v151
      %v169 = vunpack.c.l.b16 %v152
      %v170 = vunpack.c.l.b16 %v153
      %v171 = vunpack.c.l.b16 %v154
      %v172 = vunpack.c.l.b16 %v155
      %v173 = vpack.c.b16 %v166, %v165
      %v174 = vpack.c.b16 %v168, %v167
      %v175 = vpack.c.b16 %v170, %v169
      %v176 = vpack.c.b16 %v172, %v171
      %vm177 = vcmask 31744
      %v179 = vsel %vm177, %v173, 0
      %v182 = vsel %vm177, %v174, 0
      %v185 = vsel %vm177, %v175, 0
      %v188 = vsel %vm177, %v176, 0
      %vm190 = vcmask 1041408
      %v192 = vsel %vm190, %v156, 0
      %194 = vmatprep.subr.bf16.mxu0 0
      %195 = vmatpush1.bf16.msra.mxu0 %v192
      %196 = vmatprep.subr.bf16.mxu0 0
      %197 = vmatpush1.bf16.msra.mxu0 0
      %198 = vmatprep.subr.bf16.mxu0 0
      %199 = vmatpush1.bf16.msra.mxu0 0
      %200 = vmatprep.subr.bf16.mxu0 0
      %201 = vmatpush1.bf16.msra.mxu0 0
      %202 = vmatprep.subr.bf16.mxu0 0
      %203 = vmatpush1.bf16.msra.mxu0 0
      %204 = vmatprep.subr.bf16.mxu0 0
      %205 = vmatpush1.bf16.msra.mxu0 0
      %206 = vmatprep.subr.bf16.mxu0 0
      %207 = vmatpush1.bf16.msra.mxu0 0
      %208 = vmatprep.subr.bf16.mxu0 0
      %209 = vmatpush1.bf16.msra.mxu0 0
      %210 = vmatprep.subr.bf16.mxu0 0
      %211 = vmatpush1.bf16.msra.mxu0 0
      %212 = vmatprep.subr.bf16.mxu0 0
      %213 = vmatpush1.bf16.msra.mxu0 0
      %214 = vmatprep.subr.bf16.mxu0 0
      %215 = vmatpush1.bf16.msra.mxu0 0
      %216 = vmatprep.subr.bf16.mxu0 0
      %217 = vmatpush1.bf16.msra.mxu0 0
      %218 = vmatprep.subr.bf16.mxu0 0
      %219 = vmatpush1.bf16.msra.mxu0 0
      %220 = vmatprep.subr.bf16.mxu0 0
      %221 = vmatpush1.bf16.msra.mxu0 0
      %222 = vmatprep.subr.bf16.mxu0 0
      %223 = vmatpush1.bf16.msra.mxu0 0
      %224 = vmatprep.subr.bf16.mxu0 0
      %225 = vmatpush1.bf16.msra.mxu0 0
      %226 = vmatprep.mubr.bf16.mxu0 0
      %227 = vmatmul.mubr.bf16.gmra.mrb[0].mxu0 %v179
      %v228 = vpop.f32.mrb[0].mxu0
      %v229 = vadd.f32 0.0, %v228
      %v230 = vpop.f32.mrb[0].mxu0
      %v231 = vpop.f32.mrb[0].mxu0
      %v232 = vadd.f32 0.0, %v231
      %v233 = vpop.f32.mrb[0].mxu0
      %234 = vmatprep.mubr.bf16.mxu0 0
      %235 = vmatmul.mubr.bf16.gmra.mrb[0].mxu0 %v182
      %v236 = vpop.f32.mrb[0].mxu0
      %v237 = vadd.f32 0.0, %v236
      %v238 = vpop.f32.mrb[0].mxu0
      %v239 = vpop.f32.mrb[0].mxu0
      %v240 = vadd.f32 0.0, %v239
      %v241 = vpop.f32.mrb[0].mxu0
      %242 = vmatprep.mubr.bf16.mxu0 0
      %243 = vmatmul.mubr.bf16.gmra.mrb[0].mxu0 %v185
      %v244 = vpop.f32.mrb[0].mxu0
      %v245 = vadd.f32 0.0, %v244
      %v246 = vpop.f32.mrb[0].mxu0
      %v247 = vpop.f32.mrb[0].mxu0
      %v248 = vadd.f32 0.0, %v247
      %v249 = vpop.f32.mrb[0].mxu0
      %250 = vmatprep.mubr.bf16.mxu0 0
      %251 = vmatmul.mubr.bf16.gmra.mrb[0].mxu0 %v188
      %v252 = vpop.f32.mrb[0].mxu0
      %v253 = vadd.f32 0.0, %v252
      %v254 = vpop.f32.mrb[0].mxu0
      %v255 = vpop.f32.mrb[0].mxu0
      %v256 = vadd.f32 0.0, %v255
      %v257 = vpop.f32.mrb[0].mxu0
      %258 = vdwg.mxu0
      %v259 = vpack.c.bf16 %v232, %v229
      %v260 = vpack.c.bf16 %v240, %v237
      %v261 = vpack.c.bf16 %v248, %v245
      %v262 = vpack.c.bf16 %v256, %v253
      %v267 = vunpack.c.l.b16 %v259
      %v268 = vunpack.c.h.b16 %v259
      %v269 = vunpack.c.l.b16 %v260
      %v270 = vunpack.c.h.b16 %v260
      %v271 = vunpack.c.l.b16 %v261
      %v272 = vunpack.c.h.b16 %v261
      %v273 = vunpack.c.l.b16 %v262
      %v274 = vunpack.c.h.b16 %v262
      %v275 = vpack.c.b16 %v267, %v267
      %v276 = vpack.c.b16 %v268, %v268
      %v277 = vpack.c.b16 %v269, %v269
      %v278 = vpack.c.b16 %v270, %v270
      %v279 = vpack.c.b16 %v271, %v271
      %v280 = vpack.c.b16 %v272, %v272
      %v281 = vpack.c.b16 %v273, %v273
      %v282 = vpack.c.b16 %v274, %v274
      %291 = vst [vmem:[%s145] sm:$0xf] %v275
      %292 = vst [vmem:[%s145 + $0x4] sm:$0xf] %v276
      %293 = vst [vmem:[%s145 + $0x8] sm:$0xf] %v277
      %294 = vst [vmem:[%s145 + $0xc] sm:$0xf] %v278
      %295 = vst [vmem:[%s145 + $0x10] sm:$0xf] %v279
      %296 = vst [vmem:[%s145 + $0x14] sm:$0xf] %v280
      %297 = vst [vmem:[%s145 + $0x18] sm:$0xf] %v281
      %298 = vst [vmem:[%s145 + $0x1c] sm:$0xf] %v282
      %s299 = smul.u32 8, %s13
      %p300 = scmp.lt.s32.totalorder %s299, 15
      %s301 = scalar_select %p300, %s299, 15
      %s302 = smul.addr %s301, 4
      %s303 = scalar_lea.vmem %s2, %s302
      // Predicated region
      $region29: #{_lambda_.8} parent=27 // pred_check
        %p304 = pneg %p78
      $region30: #{_lambda_.8} parent=27 // pred_check_branch
        %306 = sbr.rel (%p304) target = $region32
      $region31: #{_lambda_.8} parent=27 // pred_region
        %s307 = smul.u32 8, %s13
      $region32: #{_lambda_.8} parent=27 // pred_fallthru
        _
    $region28: #{_lambda_.8} parent=5 // pred_fallthru
      _
    %p308 = scmp.le.s32.totalorder 2, %s8
    // Predicated region
    $region33: #{_lambda_.8} parent=5 // pred_check
      %p309 = pneg %p308
    $region34: #{_lambda_.8} parent=5 // pred_check_branch
      %311 = sbr.rel (%p309) target = $region36
    $region35: #{_lambda_.8} parent=5 // pred_region
      %s312 = ssub.s32 %s8, 2
      // Predicated region
      $region37: #{_lambda_.8} parent=35 // pred_check
        %p313 = pneg %p84
      $region38: #{_lambda_.8} parent=35 // pred_check_branch
        %315 = sbr.rel (%p313) target = $region40
      $region39: #{_lambda_.8} parent=35 // pred_region
        %s316 = smul.u32 8, %s14
        %p317 = scmp.lt.s32.totalorder %s316, 15
        %s318 = scalar_select %p317, %s316, 15
        %s319 = smul.addr %s318, 4
        %s320 = scalar_lea.vmem %s2, %s319
      $region40: #{_lambda_.8} parent=35 // pred_fallthru
        _
    $region36: #{_lambda_.8} parent=5 // pred_fallthru
      _
  $region6: #{_lambda_.8} parent=0 // loop_footer
    %s12 = sadd.s32 1, %s8
  $region7: #{_lambda_.8} parent=0 // loop_footer_branch
    %7 = sbr.rel target = $region3
  $region8: #{_lambda_.8} parent=0 // loop_exit
    _

// kernel: _lambda_.10
$region0: #{_lambda_.10}
  #allocation0 [shape = 'u32[]', space=smem, size = 0x4, offset = 0x4, fixed_abs, tag = 'smem constant byte address 0x4 - core index']
  #allocation1 [shape = 'u32[144,128]{1,0:T(1,128)}', space=vmem, size = 0x12000, scoped, tag = 'internal scratch']
  %s0 = inlined_call_operand.vmem [shape: bf16[128,72], index: 0, kind: input, shape index: {}]
  %s1 = inlined_call_operand.vmem [shape: bf16[72,128], index: 1, kind: input, shape index: {}]
  %s2 = inlined_call_operand.vmem [shape: f32[1,128], index: 2, kind: input, shape index: {}]
  %s3 = inlined_call_operand.vmem [shape: f32[1,128], index: 3, kind: input, shape index: {}]
  %s4 = inlined_call_operand.vmem [shape: bf16[128,128], index: 4, kind: output, shape index: {}]
  %s5 = sld [smem:[#allocation0]]
  $region49: #{_lambda_.10} parent=0
    _
  %s7 = ssub.s32 1, %s5
  %s8 = scalar_select 0, %s7, %s5
  loop: start=0, step=1, limit=4
  $region2: #{_lambda_.10} parent=0 // loop_pre_header
    _
  $region3: #{_lambda_.10} parent=0 // loop_header
    %s10 = sphi 0, %s14
    %p11 = scmp.ge.s32.totalorder %s10, 4
    %s20 = sphi 0, %s22
    %s23 = sphi 0, %s20
    %s24 = sphi 0, %s23
    %s40 = sphi 0, %s24
    %s44 = sphi 0, %s44
    %s46 = sphi 0, %s44
    %s47 = sphi 0, %s46
    %s61 = sphi 0, %s47
    %s65 = sphi 0, %s65
    %s67 = sphi 0, %s65
    %s68 = sphi 0, %s67
    %s82 = sphi 0, %s68
    %s86 = sphi 0, %s86
    %s88 = sphi 0, %s86
    %s89 = sphi 0, %s88
    %s103 = sphi 0, %s89
    %s109 = sphi 0, %s111
    %s112 = sphi 0, %s109
    %s113 = sphi 0, %s112
    %s129 = sphi 0, %s113
  $region4: #{_lambda_.10} parent=0 // loop_header_branch
    %13 = sbr.rel (%p11) target = $region8
  $region5: #{_lambda_.10} parent=0 // loop_body
    %s15 = ssub.s32 %s10, 1
    %s16 = ssub.s32 %s10, 2
    %s17 = sadd.s32 %s10, 1
    %s18 = ssub.s32 %s10, %s17
    %p19 = scmp.eq.s32.totalorder %s18, 0
    %s21 = sadd.s32 %s20, 1
    %s22 = scalar_select %p19, %s20, %s21
    %p25 = pneg %p19
    %p26 = scmp.eq.s32.totalorder %s10, 1
    %p27 = por %p25, %p26
    %p28 = scmp.ne.s32.totalorder %s20, %s23
    %p29 = scmp.eq.s32.totalorder %s10, 0
    %p30 = por %p28, %p29
    %p31 = scmp.ne.s32.totalorder %s20, %s23
    %p32 = scmp.eq.s32.totalorder %s15, 1
    %p33 = por %p31, %p32
    %p34 = scmp.ne.s32.totalorder %s23, %s24
    %p35 = scmp.eq.s32.totalorder %s15, 0
    %p36 = por %p34, %p35
    %p37 = scmp.ne.s32.totalorder %s23, %s24
    %p38 = scmp.eq.s32.totalorder %s16, 1
    %p39 = por %p37, %p38
    %p41 = scmp.ne.s32.totalorder %s24, %s40
    %p42 = scmp.eq.s32.totalorder %s16, 0
    %p43 = por %p41, %p42
    %s45 = sadd.s32 %s44, 1
    %p48 = scmp.eq.s32.totalorder %s10, 1
    %p49 = scmp.ne.s32.totalorder %s44, %s46
    %p50 = scmp.eq.s32.totalorder %s10, 0
    %p51 = por %p49, %p50
    %p52 = scmp.ne.s32.totalorder %s44, %s46
    %p53 = scmp.eq.s32.totalorder %s15, 1
    %p54 = por %p52, %p53
    %p55 = scmp.ne.s32.totalorder %s46, %s47
    %p56 = scmp.eq.s32.totalorder %s15, 0
    %p57 = por %p55, %p56
    %p58 = scmp.ne.s32.totalorder %s46, %s47
    %p59 = scmp.eq.s32.totalorder %s16, 1
    %p60 = por %p58, %p59
    %p62 = scmp.ne.s32.totalorder %s47, %s61
    %p63 = scmp.eq.s32.totalorder %s16, 0
    %p64 = por %p62, %p63
    %s66 = sadd.s32 %s65, 1
    %p69 = scmp.eq.s32.totalorder %s10, 1
    %p70 = scmp.ne.s32.totalorder %s65, %s67
    %p71 = scmp.eq.s32.totalorder %s10, 0
    %p72 = por %p70, %p71
    %p73 = scmp.ne.s32.totalorder %s65, %s67
    %p74 = scmp.eq.s32.totalorder %s15, 1
    %p75 = por %p73, %p74
    %p76 = scmp.ne.s32.totalorder %s67, %s68
    %p77 = scmp.eq.s32.totalorder %s15, 0
    %p78 = por %p76, %p77
    %p79 = scmp.ne.s32.totalorder %s67, %s68
    %p80 = scmp.eq.s32.totalorder %s16, 1
    %p81 = por %p79, %p80
    %p83 = scmp.ne.s32.totalorder %s68, %s82
    %p84 = scmp.eq.s32.totalorder %s16, 0
    %p85 = por %p83, %p84
    %s87 = sadd.s32 %s86, 1
    %p90 = scmp.eq.s32.totalorder %s10, 1
    %p91 = scmp.ne.s32.totalorder %s86, %s88
    %p92 = scmp.eq.s32.totalorder %s10, 0
    %p93 = por %p91, %p92
    %p94 = scmp.ne.s32.totalorder %s86, %s88
    %p95 = scmp.eq.s32.totalorder %s15, 1
    %p96 = por %p94, %p95
    %p97 = scmp.ne.s32.totalorder %s88, %s89
    %p98 = scmp.eq.s32.totalorder %s15, 0
    %p99 = por %p97, %p98
    %p100 = scmp.ne.s32.totalorder %s88, %s89
    %p101 = scmp.eq.s32.totalorder %s16, 1
    %p102 = por %p100, %p101
    %p104 = scmp.ne.s32.totalorder %s89, %s103
    %p105 = scmp.eq.s32.totalorder %s16, 0
    %p106 = por %p104, %p105
    %s107 = ssub.s32 %s10, %s17
    %p108 = scmp.eq.s32.totalorder %s107, 0
    %s110 = sadd.s32 %s109, 1
    %s111 = scalar_select %p108, %s109, %s110
    %p114 = pneg %p108
    %p115 = scmp.eq.s32.totalorder %s10, 1
    %p116 = por %p114, %p115
    %p117 = scmp.ne.s32.totalorder %s109, %s112
    %p118 = scmp.eq.s32.totalorder %s10, 0
    %p119 = por %p117, %p118
    %p120 = scmp.ne.s32.totalorder %s109, %s112
    %p121 = scmp.eq.s32.totalorder %s15, 1
    %p122 = por %p120, %p121
    %p123 = scmp.ne.s32.totalorder %s112, %s113
    %p124 = scmp.eq.s32.totalorder %s15, 0
    %p125 = por %p123, %p124
    %p126 = scmp.ne.s32.totalorder %s112, %s113
    %p127 = scmp.eq.s32.totalorder %s16, 1
    %p128 = por %p126, %p127
    %p130 = scmp.ne.s32.totalorder %s113, %s129
    %p131 = scmp.eq.s32.totalorder %s16, 0
    %p132 = por %p130, %p131
    %p133 = scmp.le.s32.totalorder 1, %s10
    %p134 = scmp.lt.s32.totalorder %s10, 3
    %p135 = pnand %p133, %p134
    %p136 = pneg %p135
    // Predicated region
    $region9: #{_lambda_.10} parent=5 // pred_check
      _
    $region10: #{_lambda_.10} parent=5 // pred_check_branch
      %138 = sbr.rel (%p135) target = $region12
    $region11: #{_lambda_.10} parent=5 // pred_region
      %s139 = ssub.s32 %s10, 1
      // Predicated region
      $region13: #{_lambda_.10} parent=11 // pred_check
        %p140 = pneg %p57
      $region14: #{_lambda_.10} parent=11 // pred_check_branch
        %142 = sbr.rel (%p140) target = $region16
      $region15: #{_lambda_.10} parent=11 // pred_region
        _
      $region16: #{_lambda_.10} parent=11 // pred_fallthru
        _
      // Predicated region
      $region17: #{_lambda_.10} parent=11 // pred_check
        %p143 = pneg %p78
      $region18: #{_lambda_.10} parent=11 // pred_check_branch
        %145 = sbr.rel (%p143) target = $region20
      $region19: #{_lambda_.10} parent=11 // pred_region
        _
      $region20: #{_lambda_.10} parent=11 // pred_fallthru
        _
      // Predicated region
      $region21: #{_lambda_.10} parent=11 // pred_check
        %p146 = pneg %p99
      $region22: #{_lambda_.10} parent=11 // pred_check_branch
        %148 = sbr.rel (%p146) target = $region24
      $region23: #{_lambda_.10} parent=11 // pred_region
        _
      $region24: #{_lambda_.10} parent=11 // pred_fallthru
        _
    $region12: #{_lambda_.10} parent=5 // pred_fallthru
      _
    %p149 = scmp.lt.s32.totalorder %s10, 2
    // Predicated region
    $region25: #{_lambda_.10} parent=5 // pred_check
      %p150 = pneg %p149
    $region26: #{_lambda_.10} parent=5 // pred_check_branch
      %152 = sbr.rel (%p150) target = $region28
    $region27: #{_lambda_.10} parent=5 // pred_region
      // Predicated region
      $region29: #{_lambda_.10} parent=27 // pred_check
        %p153 = pneg %p30
      $region30: #{_lambda_.10} parent=27 // pred_check_branch
        %155 = sbr.rel (%p153) target = $region32
      $region31: #{_lambda_.10} parent=27 // pred_region
        %s156 = smul.u32 8, %s10
        %p157 = scmp.lt.s32.totalorder %s156, 15
        %s158 = scalar_select %p157, %s156, 15
        %s159 = smul.addr %s158, 4
        %s160 = scalar_lea.vmem %s0, %s159
        %s161 = smul.u32 8, %s10
      $region32: #{_lambda_.10} parent=27 // pred_fallthru
        _
    $region28: #{_lambda_.10} parent=5 // pred_fallthru
      _
    %p162 = scmp.le.s32.totalorder 1, %s10
    %p163 = scmp.lt.s32.totalorder %s10, 3
    %p164 = pnand %p162, %p163
    %p165 = pneg %p164
    // Predicated region
    $region33: #{_lambda_.10} parent=5 // pred_check
      _
    $region34: #{_lambda_.10} parent=5 // pred_check_branch
      %167 = sbr.rel (%p164) target = $region36
    $region35: #{_lambda_.10} parent=5 // pred_region
      %s168 = ssub.s32 %s10, 1
      %s169 = smul.u32 8, %s15
      %p170 = scmp.lt.s32.totalorder %s169, 15
      %s171 = scalar_select %p170, %s169, 15
      %s172 = smul.addr %s171, 4
      %s173 = scalar_lea.vmem %s0, %s172
      %p174 = pneg %p36
      %p175 = pneg %p33
      %p176 = pneg %p57
      %p177 = pneg %p54
      %p178 = pneg %p78
      %p179 = pneg %p75
      %p180 = pneg %p99
      %p181 = pneg %p96
      %p182 = pneg %p125
      %p183 = pneg %p122
      %s184 = smul.u32 8, %s15
      %p185 = scmp.lt.s32.totalorder %s184, 15
      %s186 = scalar_select %p185, %s184, 15
      %s187 = smul.addr %s186, 4
      %s188 = scalar_lea.vmem %s4, %s187
      %s189 = smul.u32 8, %s15
      %p190 = scmp.lt.s32.totalorder %s189, 15
      %s191 = scalar_select %p190, %s189, 15
      %s192 = smul.addr %s191, 4
      %s193 = scalar_lea.vmem %s0, %s192
      %s194 = smul.u32 8, %s15
      %s195 = smul.u32 8, %s15
      %p196 = scmp.lt.s32.totalorder %s195, 15
      %s197 = scalar_select %p196, %s195, 15
      %s198 = smul.addr %s197, 4
      %s199 = scalar_lea.vmem %s4, %s198
      %s200 = smul.u32 8, %s15
      %v202 = vld [vmem:[%s193] sm:$0xf]
      %v203 = vld [vmem:[%s193 + $0x4] sm:$0xf]
      %v204 = vld [vmem:[%s193 + $0x8] sm:$0xf]
      %v205 = vld [vmem:[%s193 + $0xc] sm:$0xf]
      %v206 = vld [vmem:[%s193 + $0x10] sm:$0xf]
      %v207 = vld [vmem:[%s193 + $0x14] sm:$0xf]
      %v208 = vld [vmem:[%s193 + $0x18] sm:$0xf]
      %v209 = vld [vmem:[%s193 + $0x1c] sm:$0xf]
      %v210 = vld [vmem:[%s1] sm:$0xf]
      %v211 = vld [vmem:[%s1 + $0x4] sm:$0xf]
      %v212 = vld [vmem:[%s1 + $0x8] sm:$0xf]
      %v213 = vld [vmem:[%s1 + $0xc] sm:$0xf]
      %v214 = vld [vmem:[%s1 + $0x10] sm:$0xf]
      %v215 = vld [vmem:[%s1 + $0x14] sm:$0xf]
      %v216 = vld [vmem:[%s1 + $0x18] sm:$0xf]
      %v217 = vld [vmem:[%s1 + $0x1c] sm:$0xf]
      %v218 = vld [vmem:[%s1 + $0x20] sm:$0xf]
      %v227 = vunpack.c.l.b16 %v202
      %v228 = vunpack.c.l.b16 %v203
      %v229 = vunpack.c.l.b16 %v204
      %v230 = vunpack.c.l.b16 %v205
      %v231 = vunpack.c.l.b16 %v206
      %v232 = vunpack.c.l.b16 %v207
      %v233 = vunpack.c.l.b16 %v208
      %v234 = vunpack.c.l.b16 %v209
      %v235 = vpack.c.b16 %v228, %v227
      %v236 = vpack.c.b16 %v230, %v229
      %v237 = vpack.c.b16 %v232, %v231
      %v238 = vpack.c.b16 %v234, %v233
      %v248 = vunpack.c.l.b16 %v210
      %v249 = vunpack.c.l.b16 %v211
      %v250 = vunpack.c.l.b16 %v212
      %v251 = vunpack.c.l.b16 %v213
      %v252 = vunpack.c.l.b16 %v214
      %v253 = vunpack.c.l.b16 %v215
      %v254 = vunpack.c.l.b16 %v216
      %v255 = vunpack.c.l.b16 %v217
      %v256 = vunpack.c.l.b16 %v218
      %v257 = vpack.c.b16 %v249, %v248
      %v258 = vpack.c.b16 %v251, %v250
      %v259 = vpack.c.b16 %v253, %v252
      %v260 = vpack.c.b16 %v255, %v254
      %v261 = vpack.c.b16 %v256, %v256
      %vm266 = vcmask 588800
      %v268 = vsel %vm266, %v235, 0
      %v271 = vsel %vm266, %v236, 0
      %v274 = vsel %vm266, %v237, 0
      %v277 = vsel %vm266, %v238, 0
      %vm279 = vcmask 1043456
      %v281 = vsel %vm279, %v261, 0
      %283 = vmatprep.subr.bf16.mxu0 0
      %284 = vmatpush1.bf16.msra.mxu0 %v257
      %285 = vmatprep.subr.bf16.mxu0 0
      %286 = vmatpush1.bf16.msra.mxu0 %v258
      %287 = vmatprep.subr.bf16.mxu0 0
      %288 = vmatpush1.bf16.msra.mxu0 %v259
      %289 = vmatprep.subr.bf16.mxu0 0
      %290 = vmatpush1.bf16.msra.mxu0 %v260
      %291 = vmatprep.subr.bf16.mxu0 0
      %292 = vmatpush1.bf16.msra.mxu0 %v281
      %293 = vmatprep.subr.bf16.mxu0 0
      %294 = vmatpush1.bf16.msra.mxu0 0
      %295 = vmatprep.subr.bf16.mxu0 0
      %296 = vmatpush1.bf16.msra.mxu0 0
      %297 = vmatprep.subr.bf16.mxu0 0
      %298 = vmatpush1.bf16.msra.mxu0 0
      %299 = vmatprep.subr.bf16.mxu0 0
      %300 = vmatpush1.bf16.msra.mxu0 0
      %301 = vmatprep.subr.bf16.mxu0 0
      %302 = vmatpush1.bf16.msra.mxu0 0
      %303 = vmatprep.subr.bf16.mxu0 0
      %304 = vmatpush1.bf16.msra.mxu0 0
      %305 = vmatprep.subr.bf16.mxu0 0
      %306 = vmatpush1.bf16.msra.mxu0 0
      %307 = vmatprep.subr.bf16.mxu0 0
      %308 = vmatpush1.bf16.msra.mxu0 0
      %309 = vmatprep.subr.bf16.mxu0 0
      %310 = vmatpush1.bf16.msra.mxu0 0
      %311 = vmatprep.subr.bf16.mxu0 0
      %312 = vmatpush1.bf16.msra.mxu0 0
      %313 = vmatprep.subr.bf16.mxu0 0
      %314 = vmatpush1.bf16.msra.mxu0 0
      %315 = vmatprep.mubr.bf16.mxu0 0
      %316 = vmatmul.mubr.bf16.gmra.mrb[0].mxu0 %v268
      %v317 = vpop.f32.mrb[0].mxu0
      %v318 = vadd.f32 0.0, %v317
      %v319 = vpop.f32.mrb[0].mxu0
      %v320 = vpop.f32.mrb[0].mxu0
      %v321 = vadd.f32 0.0, %v320
      %v322 = vpop.f32.mrb[0].mxu0
      %323 = vmatprep.mubr.bf16.mxu0 0
      %324 = vmatmul.mubr.bf16.gmra.mrb[0].mxu0 %v271
      %v325 = vpop.f32.mrb[0].mxu0
      %v326 = vadd.f32 0.0, %v325
      %v327 = vpop.f32.mrb[0].mxu0
      %v328 = vpop.f32.mrb[0].mxu0
      %v329 = vadd.f32 0.0, %v328
      %v330 = vpop.f32.mrb[0].mxu0
      %331 = vmatprep.mubr.bf16.mxu0 0
      %332 = vmatmul.mubr.bf16.gmra.mrb[0].mxu0 %v274
      %v333 = vpop.f32.mrb[0].mxu0
      %v334 = vadd.f32 0.0, %v333
      %v335 = vpop.f32.mrb[0].mxu0
      %v336 = vpop.f32.mrb[0].mxu0
      %v337 = vadd.f32 0.0, %v336
      %v338 = vpop.f32.mrb[0].mxu0
      %339 = vmatprep.mubr.bf16.mxu0 0
      %340 = vmatmul.mubr.bf16.gmra.mrb[0].mxu0 %v277
      %v341 = vpop.f32.mrb[0].mxu0
      %v342 = vadd.f32 0.0, %v341
      %v343 = vpop.f32.mrb[0].mxu0
      %v344 = vpop.f32.mrb[0].mxu0
      %v345 = vadd.f32 0.0, %v344
      %v346 = vpop.f32.mrb[0].mxu0
      %347 = vdwg.mxu0
      %v348 = vld [vmem:[%s2] sm:$0x1]
      %v350 = vlaneseq
      %v351 = vshrl.u32 %v350, 7
      %v352 = vsub.s32 0, %v351
      %v353 = vrot.slane %v348, %v352
      %v355 = vmul.f32 %v318, %v353
      %v356 = vmul.f32 %v321, %v353
      %v357 = vmul.f32 %v326, %v353
      %v358 = vmul.f32 %v329, %v353
      %v359 = vmul.f32 %v334, %v353
      %v360 = vmul.f32 %v337, %v353
      %v361 = vmul.f32 %v342, %v353
      %v362 = vmul.f32 %v345, %v353
      %v363 = vld [vmem:[%s3] sm:$0x1]
      %v365 = vlaneseq
      %v366 = vshrl.u32 %v365, 7
      %v367 = vsub.s32 0, %v366
      %v368 = vrot.slane %v363, %v367
      %v370 = vadd.f32 %v355, %v368
      %v371 = vadd.f32 %v356, %v368
      %v372 = vadd.f32 %v357, %v368
      %v373 = vadd.f32 %v358, %v368
      %v374 = vadd.f32 %v359, %v368
      %v375 = vadd.f32 %v360, %v368
      %v376 = vadd.f32 %v361, %v368
      %v377 = vadd.f32 %v362, %v368
      %v378 = vmax.f32 %v370, 0.0
      %v379 = vmax.f32 %v371, 0.0
      %v380 = vmax.f32 %v372, 0.0
      %v381 = vmax.f32 %v373, 0.0
      %v382 = vmax.f32 %v374, 0.0
      %v383 = vmax.f32 %v375, 0.0
      %v384 = vmax.f32 %v376, 0.0
      %v385 = vmax.f32 %v377, 0.0
      %v386 = vpack.c.bf16 %v379, %v378
      %v387 = vpack.c.bf16 %v381, %v380
      %v388 = vpack.c.bf16 %v383, %v382
      %v389 = vpack.c.bf16 %v385, %v384
      %v394 = vunpack.c.l.b16 %v386
      %v395 = vunpack.c.h.b16 %v386
      %v396 = vunpack.c.l.b16 %v387
      %v397 = vunpack.c.h.b16 %v387
      %v398 = vunpack.c.l.b16 %v388
      %v399 = vunpack.c.h.b16 %v388
      %v400 = vunpack.c.l.b16 %v389
      %v401 = vunpack.c.h.b16 %v389
      %v402 = vpack.c.b16 %v394, %v394
      %v403 = vpack.c.b16 %v395, %v395
      %v404 = vpack.c.b16 %v396, %v396
      %v405 = vpack.c.b16 %v397, %v397
      %v406 = vpack.c.b16 %v398, %v398
      %v407 = vpack.c.b16 %v399, %v399
      %v408 = vpack.c.b16 %v400, %v400
      %v409 = vpack.c.b16 %v401, %v401
      %418 = vst [vmem:[%s199] sm:$0xf] %v402
      %419 = vst [vmem:[%s199 + $0x4] sm:$0xf] %v403
      %420 = vst [vmem:[%s199 + $0x8] sm:$0xf] %v404
      %421 = vst [vmem:[%s199 + $0xc] sm:$0xf] %v405
      %422 = vst [vmem:[%s199 + $0x10] sm:$0xf] %v406
      %423 = vst [vmem:[%s199 + $0x14] sm:$0xf] %v407
      %424 = vst [vmem:[%s199 + $0x18] sm:$0xf] %v408
      %425 = vst [vmem:[%s199 + $0x1c] sm:$0xf] %v409
      %s426 = smul.u32 8, %s15
      %p427 = scmp.lt.s32.totalorder %s426, 15
      %s428 = scalar_select %p427, %s426, 15
      %s429 = smul.addr %s428, 4
      %s430 = scalar_lea.vmem %s4, %s429
      // Predicated region
      $region37: #{_lambda_.10} parent=35 // pred_check
        %p431 = pneg %p122
      $region38: #{_lambda_.10} parent=35 // pred_check_branch
        %433 = sbr.rel (%p431) target = $region40
      $region39: #{_lambda_.10} parent=35 // pred_region
        %s434 = smul.u32 8, %s15
      $region40: #{_lambda_.10} parent=35 // pred_fallthru
        _
    $region36: #{_lambda_.10} parent=5 // pred_fallthru
      _
    %p435 = scmp.le.s32.totalorder 2, %s10
    // Predicated region
    $region41: #{_lambda_.10} parent=5 // pred_check
      %p436 = pneg %p435
    $region42: #{_lambda_.10} parent=5 // pred_check_branch
      %438 = sbr.rel (%p436) target = $region44
    $region43: #{_lambda_.10} parent=5 // pred_region
      %s439 = ssub.s32 %s10, 2
      // Predicated region
      $region45: #{_lambda_.10} parent=43 // pred_check
        %p440 = pneg %p128
      $region46: #{_lambda_.10} parent=43 // pred_check_branch
        %442 = sbr.rel (%p440) target = $region48
      $region47: #{_lambda_.10} parent=43 // pred_region
        %s443 = smul.u32 8, %s16
        %p444 = scmp.lt.s32.totalorder %s443, 15
        %s445 = scalar_select %p444, %s443, 15
        %s446 = smul.addr %s445, 4
        %s447 = scalar_lea.vmem %s4, %s446
      $region48: #{_lambda_.10} parent=43 // pred_fallthru
        _
    $region44: #{_lambda_.10} parent=5 // pred_fallthru
      _
  $region6: #{_lambda_.10} parent=0 // loop_footer
    %s14 = sadd.s32 1, %s10
  $region7: #{_lambda_.10} parent=0 // loop_footer_branch
    %9 = sbr.rel target = $region3
  $region8: #{_lambda_.10} parent=0 // loop_exit
    _

// kernel: _lambda_.11
$region0: #{_lambda_.11}
  #allocation0 [shape = 'u32[]', space=smem, size = 0x4, offset = 0x4, fixed_abs, tag = 'smem constant byte address 0x4 - core index']
  #allocation1 [shape = 'u32[144,128]{1,0:T(1,128)}', space=vmem, size = 0x12000, scoped, tag = 'internal scratch']
  %s0 = inlined_call_operand.vmem [shape: bf16[128,72], index: 0, kind: input, shape index: {}]
  %s1 = inlined_call_operand.vmem [shape: bf16[72,128], index: 1, kind: input, shape index: {}]
  %s2 = inlined_call_operand.vmem [shape: bf16[128,128], index: 2, kind: input, shape index: {}]
  %s3 = inlined_call_operand.vmem [shape: bf16[128,128], index: 3, kind: output, shape index: {}]
  %s4 = sld [smem:[#allocation0]]
  $region45: #{_lambda_.11} parent=0
    _
  %s6 = ssub.s32 1, %s4
  %s7 = scalar_select 0, %s6, %s4
  loop: start=0, step=1, limit=4
  $region2: #{_lambda_.11} parent=0 // loop_pre_header
    _
  $region3: #{_lambda_.11} parent=0 // loop_header
    %s9 = sphi 0, %s13
    %p10 = scmp.ge.s32.totalorder %s9, 4
    %s19 = sphi 0, %s21
    %s22 = sphi 0, %s19
    %s23 = sphi 0, %s22
    %s39 = sphi 0, %s23
    %s43 = sphi 0, %s43
    %s45 = sphi 0, %s43
    %s46 = sphi 0, %s45
    %s60 = sphi 0, %s46
    %s66 = sphi 0, %s68
    %s69 = sphi 0, %s66
    %s70 = sphi 0, %s69
    %s86 = sphi 0, %s70
    %s92 = sphi 0, %s94
    %s95 = sphi 0, %s92
    %s96 = sphi 0, %s95
    %s112 = sphi 0, %s96
  $region4: #{_lambda_.11} parent=0 // loop_header_branch
    %12 = sbr.rel (%p10) target = $region8
  $region5: #{_lambda_.11} parent=0 // loop_body
    %s14 = ssub.s32 %s9, 1
    %s15 = ssub.s32 %s9, 2
    %s16 = sadd.s32 %s9, 1
    %s17 = ssub.s32 %s9, %s16
    %p18 = scmp.eq.s32.totalorder %s17, 0
    %s20 = sadd.s32 %s19, 1
    %s21 = scalar_select %p18, %s19, %s20
    %p24 = pneg %p18
    %p25 = scmp.eq.s32.totalorder %s9, 1
    %p26 = por %p24, %p25
    %p27 = scmp.ne.s32.totalorder %s19, %s22
    %p28 = scmp.eq.s32.totalorder %s9, 0
    %p29 = por %p27, %p28
    %p30 = scmp.ne.s32.totalorder %s19, %s22
    %p31 = scmp.eq.s32.totalorder %s14, 1
    %p32 = por %p30, %p31
    %p33 = scmp.ne.s32.totalorder %s22, %s23
    %p34 = scmp.eq.s32.totalorder %s14, 0
    %p35 = por %p33, %p34
    %p36 = scmp.ne.s32.totalorder %s22, %s23
    %p37 = scmp.eq.s32.totalorder %s15, 1
    %p38 = por %p36, %p37
    %p40 = scmp.ne.s32.totalorder %s23, %s39
    %p41 = scmp.eq.s32.totalorder %s15, 0
    %p42 = por %p40, %p41
    %s44 = sadd.s32 %s43, 1
    %p47 = scmp.eq.s32.totalorder %s9, 1
    %p48 = scmp.ne.s32.totalorder %s43, %s45
    %p49 = scmp.eq.s32.totalorder %s9, 0
    %p50 = por %p48, %p49
    %p51 = scmp.ne.s32.totalorder %s43, %s45
    %p52 = scmp.eq.s32.totalorder %s14, 1
    %p53 = por %p51, %p52
    %p54 = scmp.ne.s32.totalorder %s45, %s46
    %p55 = scmp.eq.s32.totalorder %s14, 0
    %p56 = por %p54, %p55
    %p57 = scmp.ne.s32.totalorder %s45, %s46
    %p58 = scmp.eq.s32.totalorder %s15, 1
    %p59 = por %p57, %p58
    %p61 = scmp.ne.s32.totalorder %s46, %s60
    %p62 = scmp.eq.s32.totalorder %s15, 0
    %p63 = por %p61, %p62
    %s64 = ssub.s32 %s9, %s16
    %p65 = scmp.eq.s32.totalorder %s64, 0
    %s67 = sadd.s32 %s66, 1
    %s68 = scalar_select %p65, %s66, %s67
    %p71 = pneg %p65
    %p72 = scmp.eq.s32.totalorder %s9, 1
    %p73 = por %p71, %p72
    %p74 = scmp.ne.s32.totalorder %s66, %s69
    %p75 = scmp.eq.s32.totalorder %s9, 0
    %p76 = por %p74, %p75
    %p77 = scmp.ne.s32.totalorder %s66, %s69
    %p78 = scmp.eq.s32.totalorder %s14, 1
    %p79 = por %p77, %p78
    %p80 = scmp.ne.s32.totalorder %s69, %s70
    %p81 = scmp.eq.s32.totalorder %s14, 0
    %p82 = por %p80, %p81
    %p83 = scmp.ne.s32.totalorder %s69, %s70
    %p84 = scmp.eq.s32.totalorder %s15, 1
    %p85 = por %p83, %p84
    %p87 = scmp.ne.s32.totalorder %s70, %s86
    %p88 = scmp.eq.s32.totalorder %s15, 0
    %p89 = por %p87, %p88
    %s90 = ssub.s32 %s9, %s16
    %p91 = scmp.eq.s32.totalorder %s90, 0
    %s93 = sadd.s32 %s92, 1
    %s94 = scalar_select %p91, %s92, %s93
    %p97 = pneg %p91
    %p98 = scmp.eq.s32.totalorder %s9, 1
    %p99 = por %p97, %p98
    %p100 = scmp.ne.s32.totalorder %s92, %s95
    %p101 = scmp.eq.s32.totalorder %s9, 0
    %p102 = por %p100, %p101
    %p103 = scmp.ne.s32.totalorder %s92, %s95
    %p104 = scmp.eq.s32.totalorder %s14, 1
    %p105 = por %p103, %p104
    %p106 = scmp.ne.s32.totalorder %s95, %s96
    %p107 = scmp.eq.s32.totalorder %s14, 0
    %p108 = por %p106, %p107
    %p109 = scmp.ne.s32.totalorder %s95, %s96
    %p110 = scmp.eq.s32.totalorder %s15, 1
    %p111 = por %p109, %p110
    %p113 = scmp.ne.s32.totalorder %s96, %s112
    %p114 = scmp.eq.s32.totalorder %s15, 0
    %p115 = por %p113, %p114
    %p116 = scmp.le.s32.totalorder 1, %s9
    %p117 = scmp.lt.s32.totalorder %s9, 3
    %p118 = pnand %p116, %p117
    %p119 = pneg %p118
    // Predicated region
    $region9: #{_lambda_.11} parent=5 // pred_check
      _
    $region10: #{_lambda_.11} parent=5 // pred_check_branch
      %121 = sbr.rel (%p118) target = $region12
    $region11: #{_lambda_.11} parent=5 // pred_region
      %s122 = ssub.s32 %s9, 1
      // Predicated region
      $region13: #{_lambda_.11} parent=11 // pred_check
        %p123 = pneg %p56
      $region14: #{_lambda_.11} parent=11 // pred_check_branch
        %125 = sbr.rel (%p123) target = $region16
      $region15: #{_lambda_.11} parent=11 // pred_region
        _
      $region16: #{_lambda_.11} parent=11 // pred_fallthru
        _
    $region12: #{_lambda_.11} parent=5 // pred_fallthru
      _
    %p126 = scmp.lt.s32.totalorder %s9, 2
    // Predicated region
    $region17: #{_lambda_.11} parent=5 // pred_check
      %p127 = pneg %p126
    $region18: #{_lambda_.11} parent=5 // pred_check_branch
      %129 = sbr.rel (%p127) target = $region20
    $region19: #{_lambda_.11} parent=5 // pred_region
      // Predicated region
      $region21: #{_lambda_.11} parent=19 // pred_check
        %p130 = pneg %p29
      $region22: #{_lambda_.11} parent=19 // pred_check_branch
        %132 = sbr.rel (%p130) target = $region24
      $region23: #{_lambda_.11} parent=19 // pred_region
        %s133 = smul.u32 8, %s9
        %p134 = scmp.lt.s32.totalorder %s133, 15
        %s135 = scalar_select %p134, %s133, 15
        %s136 = smul.addr %s135, 4
        %s137 = scalar_lea.vmem %s0, %s136
        %s138 = smul.u32 8, %s9
      $region24: #{_lambda_.11} parent=19 // pred_fallthru
        _
      // Predicated region
      $region25: #{_lambda_.11} parent=19 // pred_check
        %p139 = pneg %p76
      $region26: #{_lambda_.11} parent=19 // pred_check_branch
        %141 = sbr.rel (%p139) target = $region28
      $region27: #{_lambda_.11} parent=19 // pred_region
        %s142 = smul.u32 8, %s9
        %p143 = scmp.lt.s32.totalorder %s142, 15
        %s144 = scalar_select %p143, %s142, 15
        %s145 = smul.addr %s144, 4
        %s146 = scalar_lea.vmem %s2, %s145
        %s147 = smul.u32 8, %s9
      $region28: #{_lambda_.11} parent=19 // pred_fallthru
        _
    $region20: #{_lambda_.11} parent=5 // pred_fallthru
      _
    %p148 = scmp.le.s32.totalorder 1, %s9
    %p149 = scmp.lt.s32.totalorder %s9, 3
    %p150 = pnand %p148, %p149
    %p151 = pneg %p150
    // Predicated region
    $region29: #{_lambda_.11} parent=5 // pred_check
      _
    $region30: #{_lambda_.11} parent=5 // pred_check_branch
      %153 = sbr.rel (%p150) target = $region32
    $region31: #{_lambda_.11} parent=5 // pred_region
      %s154 = ssub.s32 %s9, 1
      %s155 = smul.u32 8, %s14
      %p156 = scmp.lt.s32.totalorder %s155, 15
      %s157 = scalar_select %p156, %s155, 15
      %s158 = smul.addr %s157, 4
      %s159 = scalar_lea.vmem %s0, %s158
      %p160 = pneg %p35
      %p161 = pneg %p32
      %p162 = pneg %p56
      %p163 = pneg %p53
      %s164 = smul.u32 8, %s14
      %p165 = scmp.lt.s32.totalorder %s164, 15
      %s166 = scalar_select %p165, %s164, 15
      %s167 = smul.addr %s166, 4
      %s168 = scalar_lea.vmem %s2, %s167
      %p169 = pneg %p82
      %p170 = pneg %p79
      %p171 = pneg %p108
      %p172 = pneg %p105
      %s173 = smul.u32 8, %s14
      %p174 = scmp.lt.s32.totalorder %s173, 15
      %s175 = scalar_select %p174, %s173, 15
      %s176 = smul.addr %s175, 4
      %s177 = scalar_lea.vmem %s3, %s176
      %s178 = smul.u32 8, %s14
      %p179 = scmp.lt.s32.totalorder %s178, 15
      %s180 = scalar_select %p179, %s178, 15
      %s181 = smul.addr %s180, 4
      %s182 = scalar_lea.vmem %s0, %s181
      %s183 = smul.u32 8, %s14
      %s184 = smul.u32 8, %s14
      %p185 = scmp.lt.s32.totalorder %s184, 15
      %s186 = scalar_select %p185, %s184, 15
      %s187 = smul.addr %s186, 4
      %s188 = scalar_lea.vmem %s2, %s187
      %s189 = smul.u32 8, %s14
      %s190 = smul.u32 8, %s14
      %p191 = scmp.lt.s32.totalorder %s190, 15
      %s192 = scalar_select %p191, %s190, 15
      %s193 = smul.addr %s192, 4
      %s194 = scalar_lea.vmem %s3, %s193
      %s195 = smul.u32 8, %s14
      %v197 = vld [vmem:[%s182] sm:$0xf]
      %v198 = vld [vmem:[%s182 + $0x4] sm:$0xf]
      %v199 = vld [vmem:[%s182 + $0x8] sm:$0xf]
      %v200 = vld [vmem:[%s182 + $0xc] sm:$0xf]
      %v201 = vld [vmem:[%s182 + $0x10] sm:$0xf]
      %v202 = vld [vmem:[%s182 + $0x14] sm:$0xf]
      %v203 = vld [vmem:[%s182 + $0x18] sm:$0xf]
      %v204 = vld [vmem:[%s182 + $0x1c] sm:$0xf]
      %v205 = vld [vmem:[%s1] sm:$0xf]
      %v206 = vld [vmem:[%s1 + $0x4] sm:$0xf]
      %v207 = vld [vmem:[%s1 + $0x8] sm:$0xf]
      %v208 = vld [vmem:[%s1 + $0xc] sm:$0xf]
      %v209 = vld [vmem:[%s1 + $0x10] sm:$0xf]
      %v210 = vld [vmem:[%s1 + $0x14] sm:$0xf]
      %v211 = vld [vmem:[%s1 + $0x18] sm:$0xf]
      %v212 = vld [vmem:[%s1 + $0x1c] sm:$0xf]
      %v213 = vld [vmem:[%s1 + $0x20] sm:$0xf]
      %v214 = vld [vmem:[%s188] sm:$0xf]
      %v215 = vld [vmem:[%s188 + $0x4] sm:$0xf]
      %v216 = vld [vmem:[%s188 + $0x8] sm:$0xf]
      %v217 = vld [vmem:[%s188 + $0xc] sm:$0xf]
      %v218 = vld [vmem:[%s188 + $0x10] sm:$0xf]
      %v219 = vld [vmem:[%s188 + $0x14] sm:$0xf]
      %v220 = vld [vmem:[%s188 + $0x18] sm:$0xf]
      %v221 = vld [vmem:[%s188 + $0x1c] sm:$0xf]
      %v222 = vunpack.c.l.bf16 %v214
      %v223 = vunpack.c.l.bf16 %v215
      %v224 = vunpack.c.l.bf16 %v216
      %v225 = vunpack.c.l.bf16 %v217
      %v226 = vunpack.c.l.bf16 %v218
      %v227 = vunpack.c.l.bf16 %v219
      %v228 = vunpack.c.l.bf16 %v220
      %v229 = vunpack.c.l.bf16 %v221
      %v238 = vunpack.c.l.b16 %v197
      %v239 = vunpack.c.l.b16 %v198
      %v240 = vunpack.c.l.b16 %v199
      %v241 = vunpack.c.l.b16 %v200
      %v242 = vunpack.c.l.b16 %v201
      %v243 = vunpack.c.l.b16 %v202
      %v244 = vunpack.c.l.b16 %v203
      %v245 = vunpack.c.l.b16 %v204
      %v246 = vpack.c.b16 %v239, %v238
      %v247 = vpack.c.b16 %v241, %v240
      %v248 = vpack.c.b16 %v243, %v242
      %v249 = vpack.c.b16 %v245, %v244
      %v259 = vunpack.c.l.b16 %v205
      %v260 = vunpack.c.l.b16 %v206
      %v261 = vunpack.c.l.b16 %v207
      %v262 = vunpack.c.l.b16 %v208
      %v263 = vunpack.c.l.b16 %v209
      %v264 = vunpack.c.l.b16 %v210
      %v265 = vunpack.c.l.b16 %v211
      %v266 = vunpack.c.l.b16 %v212
      %v267 = vunpack.c.l.b16 %v213
      %v268 = vpack.c.b16 %v260, %v259
      %v269 = vpack.c.b16 %v262, %v261
      %v270 = vpack.c.b16 %v264, %v263
      %v271 = vpack.c.b16 %v266, %v265
      %v272 = vpack.c.b16 %v267, %v267
      %vm277 = vcmask 588800
      %v279 = vsel %vm277, %v246, 0
      %v282 = vsel %vm277, %v247, 0
      %v285 = vsel %vm277, %v248, 0
      %v288 = vsel %vm277, %v249, 0
      %vm290 = vcmask 1043456
      %v292 = vsel %vm290, %v272, 0
      %294 = vmatprep.subr.bf16.mxu0 0
      %295 = vmatpush1.bf16.msra.mxu0 %v268
      %296 = vmatprep.subr.bf16.mxu0 0
      %297 = vmatpush1.bf16.msra.mxu0 %v269
      %298 = vmatprep.subr.bf16.mxu0 0
      %299 = vmatpush1.bf16.msra.mxu0 %v270
      %300 = vmatprep.subr.bf16.mxu0 0
      %301 = vmatpush1.bf16.msra.mxu0 %v271
      %302 = vmatprep.subr.bf16.mxu0 0
      %303 = vmatpush1.bf16.msra.mxu0 %v292
      %304 = vmatprep.subr.bf16.mxu0 0
      %305 = vmatpush1.bf16.msra.mxu0 0
      %306 = vmatprep.subr.bf16.mxu0 0
      %307 = vmatpush1.bf16.msra.mxu0 0
      %308 = vmatprep.subr.bf16.mxu0 0
      %309 = vmatpush1.bf16.msra.mxu0 0
      %310 = vmatprep.subr.bf16.mxu0 0
      %311 = vmatpush1.bf16.msra.mxu0 0
      %312 = vmatprep.subr.bf16.mxu0 0
      %313 = vmatpush1.bf16.msra.mxu0 0
      %314 = vmatprep.subr.bf16.mxu0 0
      %315 = vmatpush1.bf16.msra.mxu0 0
      %316 = vmatprep.subr.bf16.mxu0 0
      %317 = vmatpush1.bf16.msra.mxu0 0
      %318 = vmatprep.subr.bf16.mxu0 0
      %319 = vmatpush1.bf16.msra.mxu0 0
      %320 = vmatprep.subr.bf16.mxu0 0
      %321 = vmatpush1.bf16.msra.mxu0 0
      %322 = vmatprep.subr.bf16.mxu0 0
      %323 = vmatpush1.bf16.msra.mxu0 0
      %324 = vmatprep.subr.bf16.mxu0 0
      %325 = vmatpush1.bf16.msra.mxu0 0
      %326 = vmatprep.mubr.bf16.mxu0 0
      %327 = vmatmul.mubr.bf16.gmra.mrb[0].mxu0 %v279
      %v328 = vpop.f32.mrb[0].mxu0
      %v329 = vadd.f32 %v222, %v328
      %v330 = vpop.f32.mrb[0].mxu0
      %v331 = vpop.f32.mrb[0].mxu0
      %v332 = vadd.f32 %v223, %v331
      %v333 = vpop.f32.mrb[0].mxu0
      %334 = vmatprep.mubr.bf16.mxu0 0
      %335 = vmatmul.mubr.bf16.gmra.mrb[0].mxu0 %v282
      %v336 = vpop.f32.mrb[0].mxu0
      %v337 = vadd.f32 %v224, %v336
      %v338 = vpop.f32.mrb[0].mxu0
      %v339 = vpop.f32.mrb[0].mxu0
      %v340 = vadd.f32 %v225, %v339
      %v341 = vpop.f32.mrb[0].mxu0
      %342 = vmatprep.mubr.bf16.mxu0 0
      %343 = vmatmul.mubr.bf16.gmra.mrb[0].mxu0 %v285
      %v344 = vpop.f32.mrb[0].mxu0
      %v345 = vadd.f32 %v226, %v344
      %v346 = vpop.f32.mrb[0].mxu0
      %v347 = vpop.f32.mrb[0].mxu0
      %v348 = vadd.f32 %v227, %v347
      %v349 = vpop.f32.mrb[0].mxu0
      %350 = vmatprep.mubr.bf16.mxu0 0
      %351 = vmatmul.mubr.bf16.gmra.mrb[0].mxu0 %v288
      %v352 = vpop.f32.mrb[0].mxu0
      %v353 = vadd.f32 %v228, %v352
      %v354 = vpop.f32.mrb[0].mxu0
      %v355 = vpop.f32.mrb[0].mxu0
      %v356 = vadd.f32 %v229, %v355
      %v357 = vpop.f32.mrb[0].mxu0
      %358 = vdwg.mxu0
      %v359 = vpack.c.bf16 %v332, %v329
      %v360 = vpack.c.bf16 %v340, %v337
      %v361 = vpack.c.bf16 %v348, %v345
      %v362 = vpack.c.bf16 %v356, %v353
      %v367 = vunpack.c.l.b16 %v359
      %v368 = vunpack.c.h.b16 %v359
      %v369 = vunpack.c.l.b16 %v360
      %v370 = vunpack.c.h.b16 %v360
      %v371 = vunpack.c.l.b16 %v361
      %v372 = vunpack.c.h.b16 %v361
      %v373 = vunpack.c.l.b16 %v362
      %v374 = vunpack.c.h.b16 %v362
      %v375 = vpack.c.b16 %v367, %v367
      %v376 = vpack.c.b16 %v368, %v368
      %v377 = vpack.c.b16 %v369, %v369
      %v378 = vpack.c.b16 %v370, %v370
      %v379 = vpack.c.b16 %v371, %v371
      %v380 = vpack.c.b16 %v372, %v372
      %v381 = vpack.c.b16 %v373, %v373
      %v382 = vpack.c.b16 %v374, %v374
      %391 = vst [vmem:[%s194] sm:$0xf] %v375
      %392 = vst [vmem:[%s194 + $0x4] sm:$0xf] %v376
      %393 = vst [vmem:[%s194 + $0x8] sm:$0xf] %v377
      %394 = vst [vmem:[%s194 + $0xc] sm:$0xf] %v378
      %395 = vst [vmem:[%s194 + $0x10] sm:$0xf] %v379
      %396 = vst [vmem:[%s194 + $0x14] sm:$0xf] %v380
      %397 = vst [vmem:[%s194 + $0x18] sm:$0xf] %v381
      %398 = vst [vmem:[%s194 + $0x1c] sm:$0xf] %v382
      %s399 = smul.u32 8, %s14
      %p400 = scmp.lt.s32.totalorder %s399, 15
      %s401 = scalar_select %p400, %s399, 15
      %s402 = smul.addr %s401, 4
      %s403 = scalar_lea.vmem %s3, %s402
      // Predicated region
      $region33: #{_lambda_.11} parent=31 // pred_check
        %p404 = pneg %p105
      $region34: #{_lambda_.11} parent=31 // pred_check_branch
        %406 = sbr.rel (%p404) target = $region36
      $region35: #{_lambda_.11} parent=31 // pred_region
        %s407 = smul.u32 8, %s14
      $region36: #{_lambda_.11} parent=31 // pred_fallthru
        _
    $region32: #{_lambda_.11} parent=5 // pred_fallthru
      _
    %p408 = scmp.le.s32.totalorder 2, %s9
    // Predicated region
    $region37: #{_lambda_.11} parent=5 // pred_check
      %p409 = pneg %p408
    $region38: #{_lambda_.11} parent=5 // pred_check_branch
      %411 = sbr.rel (%p409) target = $region40
    $region39: #{_lambda_.11} parent=5 // pred_region
      %s412 = ssub.s32 %s9, 2
      // Predicated region
      $region41: #{_lambda_.11} parent=39 // pred_check
        %p413 = pneg %p111
      $region42: #{_lambda_.11} parent=39 // pred_check_branch
        %415 = sbr.rel (%p413) target = $region44
      $region43: #{_lambda_.11} parent=39 // pred_region
        %s416 = smul.u32 8, %s15
        %p417 = scmp.lt.s32.totalorder %s416, 15
        %s418 = scalar_select %p417, %s416, 15
        %s419 = smul.addr %s418, 4
        %s420 = scalar_lea.vmem %s3, %s419
      $region44: #{_lambda_.11} parent=39 // pred_fallthru
        _
    $region40: #{_lambda_.11} parent=5 // pred_fallthru
      _
  $region6: #{_lambda_.11} parent=0 // loop_footer
    %s13 = sadd.s32 1, %s9
  $region7: #{_lambda_.11} parent=0 // loop_footer_branch
    %8 = sbr.rel target = $region3
  $region8: #{_lambda_.11} parent=0 // loop_exit
    _

// kernel: _lambda_.9
$region0: #{_lambda_.9}
  #allocation0 [shape = 'u32[]', space=smem, size = 0x4, offset = 0x4, fixed_abs, tag = 'smem constant byte address 0x4 - core index']
  #allocation1 [shape = 'u32[144,128]{1,0:T(1,128)}', space=vmem, size = 0x12000, scoped, tag = 'internal scratch']
  %s0 = inlined_call_operand.vmem [shape: bf16[128,72], index: 0, kind: input, shape index: {}]
  %s1 = inlined_call_operand.vmem [shape: bf16[72,128], index: 1, kind: input, shape index: {}]
  %s2 = inlined_call_operand.vmem [shape: bf16[128,128], index: 2, kind: input, shape index: {}]
  %s3 = inlined_call_operand.vmem [shape: f32[1,128], index: 3, kind: input, shape index: {}]
  %s4 = inlined_call_operand.vmem [shape: f32[1,128], index: 4, kind: input, shape index: {}]
  %s5 = inlined_call_operand.vmem [shape: bf16[128,128], index: 5, kind: output, shape index: {0}]
  %s6 = inlined_call_operand.vmem [shape: bf16[128,128], index: 6, kind: output, shape index: {1}]
  %7 = xla_tuple %s5, %s6
  %s8 = sld [smem:[#allocation0]]
  $region61: #{_lambda_.9} parent=0
    _
  %s10 = ssub.s32 1, %s8
  %s11 = scalar_select 0, %s10, %s8
  loop: start=0, step=1, limit=4
  $region2: #{_lambda_.9} parent=0 // loop_pre_header
    _
  $region3: #{_lambda_.9} parent=0 // loop_header
    %s13 = sphi 0, %s17
    %p14 = scmp.ge.s32.totalorder %s13, 4
    %s23 = sphi 0, %s25
    %s26 = sphi 0, %s23
    %s27 = sphi 0, %s26
    %s43 = sphi 0, %s27
    %s47 = sphi 0, %s47
    %s49 = sphi 0, %s47
    %s50 = sphi 0, %s49
    %s64 = sphi 0, %s50
    %s70 = sphi 0, %s72
    %s73 = sphi 0, %s70
    %s74 = sphi 0, %s73
    %s90 = sphi 0, %s74
    %s94 = sphi 0, %s94
    %s96 = sphi 0, %s94
    %s97 = sphi 0, %s96
    %s111 = sphi 0, %s97
    %s115 = sphi 0, %s115
    %s117 = sphi 0, %s115
    %s118 = sphi 0, %s117
    %s132 = sphi 0, %s118
    %s138 = sphi 0, %s140
    %s141 = sphi 0, %s138
    %s142 = sphi 0, %s141
    %s158 = sphi 0, %s142
    %s164 = sphi 0, %s166
    %s167 = sphi 0, %s164
    %s168 = sphi 0, %s167
    %s184 = sphi 0, %s168
  $region4: #{_lambda_.9} parent=0 // loop_header_branch
    %16 = sbr.rel (%p14) target = $region8
  $region5: #{_lambda_.9} parent=0 // loop_body
    %s18 = ssub.s32 %s13, 1
    %s19 = ssub.s32 %s13, 2
    %s20 = sadd.s32 %s13, 1
    %s21 = ssub.s32 %s13, %s20
    %p22 = scmp.eq.s32.totalorder %s21, 0
    %s24 = sadd.s32 %s23, 1
    %s25 = scalar_select %p22, %s23, %s24
    %p28 = pneg %p22
    %p29 = scmp.eq.s32.totalorder %s13, 1
    %p30 = por %p28, %p29
    %p31 = scmp.ne.s32.totalorder %s23, %s26
    %p32 = scmp.eq.s32.totalorder %s13, 0
    %p33 = por %p31, %p32
    %p34 = scmp.ne.s32.totalorder %s23, %s26
    %p35 = scmp.eq.s32.totalorder %s18, 1
    %p36 = por %p34, %p35
    %p37 = scmp.ne.s32.totalorder %s26, %s27
    %p38 = scmp.eq.s32.totalorder %s18, 0
    %p39 = por %p37, %p38
    %p40 = scmp.ne.s32.totalorder %s26, %s27
    %p41 = scmp.eq.s32.totalorder %s19, 1
    %p42 = por %p40, %p41
    %p44 = scmp.ne.s32.totalorder %s27, %s43
    %p45 = scmp.eq.s32.totalorder %s19, 0
    %p46 = por %p44, %p45
    %s48 = sadd.s32 %s47, 1
    %p51 = scmp.eq.s32.totalorder %s13, 1
    %p52 = scmp.ne.s32.totalorder %s47, %s49
    %p53 = scmp.eq.s32.totalorder %s13, 0
    %p54 = por %p52, %p53
    %p55 = scmp.ne.s32.totalorder %s47, %s49
    %p56 = scmp.eq.s32.totalorder %s18, 1
    %p57 = por %p55, %p56
    %p58 = scmp.ne.s32.totalorder %s49, %s50
    %p59 = scmp.eq.s32.totalorder %s18, 0
    %p60 = por %p58, %p59
    %p61 = scmp.ne.s32.totalorder %s49, %s50
    %p62 = scmp.eq.s32.totalorder %s19, 1
    %p63 = por %p61, %p62
    %p65 = scmp.ne.s32.totalorder %s50, %s64
    %p66 = scmp.eq.s32.totalorder %s19, 0
    %p67 = por %p65, %p66
    %s68 = ssub.s32 %s13, %s20
    %p69 = scmp.eq.s32.totalorder %s68, 0
    %s71 = sadd.s32 %s70, 1
    %s72 = scalar_select %p69, %s70, %s71
    %p75 = pneg %p69
    %p76 = scmp.eq.s32.totalorder %s13, 1
    %p77 = por %p75, %p76
    %p78 = scmp.ne.s32.totalorder %s70, %s73
    %p79 = scmp.eq.s32.totalorder %s13, 0
    %p80 = por %p78, %p79
    %p81 = scmp.ne.s32.totalorder %s70, %s73
    %p82 = scmp.eq.s32.totalorder %s18, 1
    %p83 = por %p81, %p82
    %p84 = scmp.ne.s32.totalorder %s73, %s74
    %p85 = scmp.eq.s32.totalorder %s18, 0
    %p86 = por %p84, %p85
    %p87 = scmp.ne.s32.totalorder %s73, %s74
    %p88 = scmp.eq.s32.totalorder %s19, 1
    %p89 = por %p87, %p88
    %p91 = scmp.ne.s32.totalorder %s74, %s90
    %p92 = scmp.eq.s32.totalorder %s19, 0
    %p93 = por %p91, %p92
    %s95 = sadd.s32 %s94, 1
    %p98 = scmp.eq.s32.totalorder %s13, 1
    %p99 = scmp.ne.s32.totalorder %s94, %s96
    %p100 = scmp.eq.s32.totalorder %s13, 0
    %p101 = por %p99, %p100
    %p102 = scmp.ne.s32.totalorder %s94, %s96
    %p103 = scmp.eq.s32.totalorder %s18, 1
    %p104 = por %p102, %p103
    %p105 = scmp.ne.s32.totalorder %s96, %s97
    %p106 = scmp.eq.s32.totalorder %s18, 0
    %p107 = por %p105, %p106
    %p108 = scmp.ne.s32.totalorder %s96, %s97
    %p109 = scmp.eq.s32.totalorder %s19, 1
    %p110 = por %p108, %p109
    %p112 = scmp.ne.s32.totalorder %s97, %s111
    %p113 = scmp.eq.s32.totalorder %s19, 0
    %p114 = por %p112, %p113
    %s116 = sadd.s32 %s115, 1
    %p119 = scmp.eq.s32.totalorder %s13, 1
    %p120 = scmp.ne.s32.totalorder %s115, %s117
    %p121 = scmp.eq.s32.totalorder %s13, 0
    %p122 = por %p120, %p121
    %p123 = scmp.ne.s32.totalorder %s115, %s117
    %p124 = scmp.eq.s32.totalorder %s18, 1
    %p125 = por %p123, %p124
    %p126 = scmp.ne.s32.totalorder %s117, %s118
    %p127 = scmp.eq.s32.totalorder %s18, 0
    %p128 = por %p126, %p127
    %p129 = scmp.ne.s32.totalorder %s117, %s118
    %p130 = scmp.eq.s32.totalorder %s19, 1
    %p131 = por %p129, %p130
    %p133 = scmp.ne.s32.totalorder %s118, %s132
    %p134 = scmp.eq.s32.totalorder %s19, 0
    %p135 = por %p133, %p134
    %s136 = ssub.s32 %s13, %s20
    %p137 = scmp.eq.s32.totalorder %s136, 0
    %s139 = sadd.s32 %s138, 1
    %s140 = scalar_select %p137, %s138, %s139
    %p143 = pneg %p137
    %p144 = scmp.eq.s32.totalorder %s13, 1
    %p145 = por %p143, %p144
    %p146 = scmp.ne.s32.totalorder %s138, %s141
    %p147 = scmp.eq.s32.totalorder %s13, 0
    %p148 = por %p146, %p147
    %p149 = scmp.ne.s32.totalorder %s138, %s141
    %p150 = scmp.eq.s32.totalorder %s18, 1
    %p151 = por %p149, %p150
    %p152 = scmp.ne.s32.totalorder %s141, %s142
    %p153 = scmp.eq.s32.totalorder %s18, 0
    %p154 = por %p152, %p153
    %p155 = scmp.ne.s32.totalorder %s141, %s142
    %p156 = scmp.eq.s32.totalorder %s19, 1
    %p157 = por %p155, %p156
    %p159 = scmp.ne.s32.totalorder %s142, %s158
    %p160 = scmp.eq.s32.totalorder %s19, 0
    %p161 = por %p159, %p160
    %s162 = ssub.s32 %s13, %s20
    %p163 = scmp.eq.s32.totalorder %s162, 0
    %s165 = sadd.s32 %s164, 1
    %s166 = scalar_select %p163, %s164, %s165
    %p169 = pneg %p163
    %p170 = scmp.eq.s32.totalorder %s13, 1
    %p171 = por %p169, %p170
    %p172 = scmp.ne.s32.totalorder %s164, %s167
    %p173 = scmp.eq.s32.totalorder %s13, 0
    %p174 = por %p172, %p173
    %p175 = scmp.ne.s32.totalorder %s164, %s167
    %p176 = scmp.eq.s32.totalorder %s18, 1
    %p177 = por %p175, %p176
    %p178 = scmp.ne.s32.totalorder %s167, %s168
    %p179 = scmp.eq.s32.totalorder %s18, 0
    %p180 = por %p178, %p179
    %p181 = scmp.ne.s32.totalorder %s167, %s168
    %p182 = scmp.eq.s32.totalorder %s19, 1
    %p183 = por %p181, %p182
    %p185 = scmp.ne.s32.totalorder %s168, %s184
    %p186 = scmp.eq.s32.totalorder %s19, 0
    %p187 = por %p185, %p186
    %p188 = scmp.le.s32.totalorder 1, %s13
    %p189 = scmp.lt.s32.totalorder %s13, 3
    %p190 = pnand %p188, %p189
    %p191 = pneg %p190
    // Predicated region
    $region9: #{_lambda_.9} parent=5 // pred_check
      _
    $region10: #{_lambda_.9} parent=5 // pred_check_branch
      %193 = sbr.rel (%p190) target = $region12
    $region11: #{_lambda_.9} parent=5 // pred_region
      %s194 = ssub.s32 %s13, 1
      // Predicated region
      $region13: #{_lambda_.9} parent=11 // pred_check
        %p195 = pneg %p60
      $region14: #{_lambda_.9} parent=11 // pred_check_branch
        %197 = sbr.rel (%p195) target = $region16
      $region15: #{_lambda_.9} parent=11 // pred_region
        _
      $region16: #{_lambda_.9} parent=11 // pred_fallthru
        _
      // Predicated region
      $region17: #{_lambda_.9} parent=11 // pred_check
        %p198 = pneg %p107
      $region18: #{_lambda_.9} parent=11 // pred_check_branch
        %200 = sbr.rel (%p198) target = $region20
      $region19: #{_lambda_.9} parent=11 // pred_region
        _
      $region20: #{_lambda_.9} parent=11 // pred_fallthru
        _
      // Predicated region
      $region21: #{_lambda_.9} parent=11 // pred_check
        %p201 = pneg %p128
      $region22: #{_lambda_.9} parent=11 // pred_check_branch
        %203 = sbr.rel (%p201) target = $region24
      $region23: #{_lambda_.9} parent=11 // pred_region
        _
      $region24: #{_lambda_.9} parent=11 // pred_fallthru
        _
    $region12: #{_lambda_.9} parent=5 // pred_fallthru
      _
    %p204 = scmp.lt.s32.totalorder %s13, 2
    // Predicated region
    $region25: #{_lambda_.9} parent=5 // pred_check
      %p205 = pneg %p204
    $region26: #{_lambda_.9} parent=5 // pred_check_branch
      %207 = sbr.rel (%p205) target = $region28
    $region27: #{_lambda_.9} parent=5 // pred_region
      // Predicated region
      $region29: #{_lambda_.9} parent=27 // pred_check
        %p208 = pneg %p33
      $region30: #{_lambda_.9} parent=27 // pred_check_branch
        %210 = sbr.rel (%p208) target = $region32
      $region31: #{_lambda_.9} parent=27 // pred_region
        %s211 = smul.u32 8, %s13
        %p212 = scmp.lt.s32.totalorder %s211, 15
        %s213 = scalar_select %p212, %s211, 15
        %s214 = smul.addr %s213, 4
        %s215 = scalar_lea.vmem %s0, %s214
        %s216 = smul.u32 8, %s13
      $region32: #{_lambda_.9} parent=27 // pred_fallthru
        _
      // Predicated region
      $region33: #{_lambda_.9} parent=27 // pred_check
        %p217 = pneg %p80
      $region34: #{_lambda_.9} parent=27 // pred_check_branch
        %219 = sbr.rel (%p217) target = $region36
      $region35: #{_lambda_.9} parent=27 // pred_region
        %s220 = smul.u32 8, %s13
        %p221 = scmp.lt.s32.totalorder %s220, 15
        %s222 = scalar_select %p221, %s220, 15
        %s223 = smul.addr %s222, 4
        %s224 = scalar_lea.vmem %s2, %s223
        %s225 = smul.u32 8, %s13
      $region36: #{_lambda_.9} parent=27 // pred_fallthru
        _
    $region28: #{_lambda_.9} parent=5 // pred_fallthru
      _
    %p226 = scmp.le.s32.totalorder 1, %s13
    %p227 = scmp.lt.s32.totalorder %s13, 3
    %p228 = pnand %p226, %p227
    %p229 = pneg %p228
    // Predicated region
    $region37: #{_lambda_.9} parent=5 // pred_check
      _
    $region38: #{_lambda_.9} parent=5 // pred_check_branch
      %231 = sbr.rel (%p228) target = $region40
    $region39: #{_lambda_.9} parent=5 // pred_region
      %s232 = ssub.s32 %s13, 1
      %s233 = smul.u32 8, %s18
      %p234 = scmp.lt.s32.totalorder %s233, 15
      %s235 = scalar_select %p234, %s233, 15
      %s236 = smul.addr %s235, 4
      %s237 = scalar_lea.vmem %s0, %s236
      %p238 = pneg %p39
      %p239 = pneg %p36
      %p240 = pneg %p60
      %p241 = pneg %p57
      %s242 = smul.u32 8, %s18
      %p243 = scmp.lt.s32.totalorder %s242, 15
      %s244 = scalar_select %p243, %s242, 15
      %s245 = smul.addr %s244, 4
      %s246 = scalar_lea.vmem %s2, %s245
      %p247 = pneg %p86
      %p248 = pneg %p83
      %p249 = pneg %p107
      %p250 = pneg %p104
      %p251 = pneg %p128
      %p252 = pneg %p125
      %p253 = pneg %p154
      %p254 = pneg %p151
      %s255 = smul.u32 8, %s18
      %p256 = scmp.lt.s32.totalorder %s255, 15
      %s257 = scalar_select %p256, %s255, 15
      %s258 = smul.addr %s257, 4
      %s259 = scalar_lea.vmem %s5, %s258
      %p260 = pneg %p180
      %p261 = pneg %p177
      %s262 = smul.u32 8, %s18
      %p263 = scmp.lt.s32.totalorder %s262, 15
      %s264 = scalar_select %p263, %s262, 15
      %s265 = smul.addr %s264, 4
      %s266 = scalar_lea.vmem %s6, %s265
      %s267 = smul.u32 8, %s18
      %p268 = scmp.lt.s32.totalorder %s267, 15
      %s269 = scalar_select %p268, %s267, 15
      %s270 = smul.addr %s269, 4
      %s271 = scalar_lea.vmem %s0, %s270
      %s272 = smul.u32 8, %s18
      %s273 = smul.u32 8, %s18
      %p274 = scmp.lt.s32.totalorder %s273, 15
      %s275 = scalar_select %p274, %s273, 15
      %s276 = smul.addr %s275, 4
      %s277 = scalar_lea.vmem %s2, %s276
      %s278 = smul.u32 8, %s18
      %s279 = smul.u32 8, %s18
      %p280 = scmp.lt.s32.totalorder %s279, 15
      %s281 = scalar_select %p280, %s279, 15
      %s282 = smul.addr %s281, 4
      %s283 = scalar_lea.vmem %s5, %s282
      %s284 = smul.u32 8, %s18
      %s285 = smul.u32 8, %s18
      %p286 = scmp.lt.s32.totalorder %s285, 15
      %s287 = scalar_select %p286, %s285, 15
      %s288 = smul.addr %s287, 4
      %s289 = scalar_lea.vmem %s6, %s288
      %s290 = smul.u32 8, %s18
      %v292 = vld [vmem:[%s271] sm:$0xf]
      %v293 = vld [vmem:[%s271 + $0x4] sm:$0xf]
      %v294 = vld [vmem:[%s271 + $0x8] sm:$0xf]
      %v295 = vld [vmem:[%s271 + $0xc] sm:$0xf]
      %v296 = vld [vmem:[%s271 + $0x10] sm:$0xf]
      %v297 = vld [vmem:[%s271 + $0x14] sm:$0xf]
      %v298 = vld [vmem:[%s271 + $0x18] sm:$0xf]
      %v299 = vld [vmem:[%s271 + $0x1c] sm:$0xf]
      %v300 = vld [vmem:[%s1] sm:$0xf]
      %v301 = vld [vmem:[%s1 + $0x4] sm:$0xf]
      %v302 = vld [vmem:[%s1 + $0x8] sm:$0xf]
      %v303 = vld [vmem:[%s1 + $0xc] sm:$0xf]
      %v304 = vld [vmem:[%s1 + $0x10] sm:$0xf]
      %v305 = vld [vmem:[%s1 + $0x14] sm:$0xf]
      %v306 = vld [vmem:[%s1 + $0x18] sm:$0xf]
      %v307 = vld [vmem:[%s1 + $0x1c] sm:$0xf]
      %v308 = vld [vmem:[%s1 + $0x20] sm:$0xf]
      %v309 = vld [vmem:[%s277] sm:$0xf]
      %v310 = vld [vmem:[%s277 + $0x4] sm:$0xf]
      %v311 = vld [vmem:[%s277 + $0x8] sm:$0xf]
      %v312 = vld [vmem:[%s277 + $0xc] sm:$0xf]
      %v313 = vld [vmem:[%s277 + $0x10] sm:$0xf]
      %v314 = vld [vmem:[%s277 + $0x14] sm:$0xf]
      %v315 = vld [vmem:[%s277 + $0x18] sm:$0xf]
      %v316 = vld [vmem:[%s277 + $0x1c] sm:$0xf]
      %v317 = vunpack.c.l.bf16 %v309
      %v318 = vunpack.c.l.bf16 %v310
      %v319 = vunpack.c.l.bf16 %v311
      %v320 = vunpack.c.l.bf16 %v312
      %v321 = vunpack.c.l.bf16 %v313
      %v322 = vunpack.c.l.bf16 %v314
      %v323 = vunpack.c.l.bf16 %v315
      %v324 = vunpack.c.l.bf16 %v316
      %v333 = vunpack.c.l.b16 %v292
      %v334 = vunpack.c.l.b16 %v293
      %v335 = vunpack.c.l.b16 %v294
      %v336 = vunpack.c.l.b16 %v295
      %v337 = vunpack.c.l.b16 %v296
      %v338 = vunpack.c.l.b16 %v297
      %v339 = vunpack.c.l.b16 %v298
      %v340 = vunpack.c.l.b16 %v299
      %v341 = vpack.c.b16 %v334, %v333
      %v342 = vpack.c.b16 %v336, %v335
      %v343 = vpack.c.b16 %v338, %v337
      %v344 = vpack.c.b16 %v340, %v339
      %v354 = vunpack.c.l.b16 %v300
      %v355 = vunpack.c.l.b16 %v301
      %v356 = vunpack.c.l.b16 %v302
      %v357 = vunpack.c.l.b16 %v303
      %v358 = vunpack.c.l.b16 %v304
      %v359 = vunpack.c.l.b16 %v305
      %v360 = vunpack.c.l.b16 %v306
      %v361 = vunpack.c.l.b16 %v307
      %v362 = vunpack.c.l.b16 %v308
      %v363 = vpack.c.b16 %v355, %v354
      %v364 = vpack.c.b16 %v357, %v356
      %v365 = vpack.c.b16 %v359, %v358
      %v366 = vpack.c.b16 %v361, %v360
      %v367 = vpack.c.b16 %v362, %v362
      %vm372 = vcmask 588800
      %v374 = vsel %vm372, %v341, 0
      %v377 = vsel %vm372, %v342, 0
      %v380 = vsel %vm372, %v343, 0
      %v383 = vsel %vm372, %v344, 0
      %vm385 = vcmask 1043456
      %v387 = vsel %vm385, %v367, 0
      %389 = vmatprep.subr.bf16.mxu0 0
      %390 = vmatpush1.bf16.msra.mxu0 %v363
      %391 = vmatprep.subr.bf16.mxu0 0
      %392 = vmatpush1.bf16.msra.mxu0 %v364
      %393 = vmatprep.subr.bf16.mxu0 0
      %394 = vmatpush1.bf16.msra.mxu0 %v365
      %395 = vmatprep.subr.bf16.mxu0 0
      %396 = vmatpush1.bf16.msra.mxu0 %v366
      %397 = vmatprep.subr.bf16.mxu0 0
      %398 = vmatpush1.bf16.msra.mxu0 %v387
      %399 = vmatprep.subr.bf16.mxu0 0
      %400 = vmatpush1.bf16.msra.mxu0 0
      %401 = vmatprep.subr.bf16.mxu0 0
      %402 = vmatpush1.bf16.msra.mxu0 0
      %403 = vmatprep.subr.bf16.mxu0 0
      %404 = vmatpush1.bf16.msra.mxu0 0
      %405 = vmatprep.subr.bf16.mxu0 0
      %406 = vmatpush1.bf16.msra.mxu0 0
      %407 = vmatprep.subr.bf16.mxu0 0
      %408 = vmatpush1.bf16.msra.mxu0 0
      %409 = vmatprep.subr.bf16.mxu0 0
      %410 = vmatpush1.bf16.msra.mxu0 0
      %411 = vmatprep.subr.bf16.mxu0 0
      %412 = vmatpush1.bf16.msra.mxu0 0
      %413 = vmatprep.subr.bf16.mxu0 0
      %414 = vmatpush1.bf16.msra.mxu0 0
      %415 = vmatprep.subr.bf16.mxu0 0
      %416 = vmatpush1.bf16.msra.mxu0 0
      %417 = vmatprep.subr.bf16.mxu0 0
      %418 = vmatpush1.bf16.msra.mxu0 0
      %419 = vmatprep.subr.bf16.mxu0 0
      %420 = vmatpush1.bf16.msra.mxu0 0
      %421 = vmatprep.mubr.bf16.mxu0 0
      %422 = vmatmul.mubr.bf16.gmra.mrb[0].mxu0 %v374
      %v423 = vpop.f32.mrb[0].mxu0
      %v424 = vadd.f32 %v317, %v423
      %v425 = vpop.f32.mrb[0].mxu0
      %v426 = vpop.f32.mrb[0].mxu0
      %v427 = vadd.f32 %v318, %v426
      %v428 = vpop.f32.mrb[0].mxu0
      %429 = vmatprep.mubr.bf16.mxu0 0
      %430 = vmatmul.mubr.bf16.gmra.mrb[0].mxu0 %v377
      %v431 = vpop.f32.mrb[0].mxu0
      %v432 = vadd.f32 %v319, %v431
      %v433 = vpop.f32.mrb[0].mxu0
      %v434 = vpop.f32.mrb[0].mxu0
      %v435 = vadd.f32 %v320, %v434
      %v436 = vpop.f32.mrb[0].mxu0
      %437 = vmatprep.mubr.bf16.mxu0 0
      %438 = vmatmul.mubr.bf16.gmra.mrb[0].mxu0 %v380
      %v439 = vpop.f32.mrb[0].mxu0
      %v440 = vadd.f32 %v321, %v439
      %v441 = vpop.f32.mrb[0].mxu0
      %v442 = vpop.f32.mrb[0].mxu0
      %v443 = vadd.f32 %v322, %v442
      %v444 = vpop.f32.mrb[0].mxu0
      %445 = vmatprep.mubr.bf16.mxu0 0
      %446 = vmatmul.mubr.bf16.gmra.mrb[0].mxu0 %v383
      %v447 = vpop.f32.mrb[0].mxu0
      %v448 = vadd.f32 %v323, %v447
      %v449 = vpop.f32.mrb[0].mxu0
      %v450 = vpop.f32.mrb[0].mxu0
      %v451 = vadd.f32 %v324, %v450
      %v452 = vpop.f32.mrb[0].mxu0
      %453 = vdwg.mxu0
      %v454 = vpack.c.bf16 %v427, %v424
      %v455 = vpack.c.bf16 %v435, %v432
      %v456 = vpack.c.bf16 %v443, %v440
      %v457 = vpack.c.bf16 %v451, %v448
      %v462 = vunpack.c.l.b16 %v454
      %v463 = vunpack.c.h.b16 %v454
      %v464 = vunpack.c.l.b16 %v455
      %v465 = vunpack.c.h.b16 %v455
      %v466 = vunpack.c.l.b16 %v456
      %v467 = vunpack.c.h.b16 %v456
      %v468 = vunpack.c.l.b16 %v457
      %v469 = vunpack.c.h.b16 %v457
      %v470 = vpack.c.b16 %v462, %v462
      %v471 = vpack.c.b16 %v463, %v463
      %v472 = vpack.c.b16 %v464, %v464
      %v473 = vpack.c.b16 %v465, %v465
      %v474 = vpack.c.b16 %v466, %v466
      %v475 = vpack.c.b16 %v467, %v467
      %v476 = vpack.c.b16 %v468, %v468
      %v477 = vpack.c.b16 %v469, %v469
      %486 = vst [vmem:[%s283] sm:$0xf] %v470
      %487 = vst [vmem:[%s283 + $0x4] sm:$0xf] %v471
      %488 = vst [vmem:[%s283 + $0x8] sm:$0xf] %v472
      %489 = vst [vmem:[%s283 + $0xc] sm:$0xf] %v473
      %490 = vst [vmem:[%s283 + $0x10] sm:$0xf] %v474
      %491 = vst [vmem:[%s283 + $0x14] sm:$0xf] %v475
      %492 = vst [vmem:[%s283 + $0x18] sm:$0xf] %v476
      %493 = vst [vmem:[%s283 + $0x1c] sm:$0xf] %v477
      %v494 = vld [vmem:[%s3] sm:$0x1]
      %v496 = vlaneseq
      %v497 = vshrl.u32 %v496, 7
      %v498 = vsub.s32 0, %v497
      %v499 = vrot.slane %v494, %v498
      %v501 = vmul.f32 %v424, %v499
      %v502 = vmul.f32 %v427, %v499
      %v503 = vmul.f32 %v432, %v499
      %v504 = vmul.f32 %v435, %v499
      %v505 = vmul.f32 %v440, %v499
      %v506 = vmul.f32 %v443, %v499
      %v507 = vmul.f32 %v448, %v499
      %v508 = vmul.f32 %v451, %v499
      %v509 = vld [vmem:[%s4] sm:$0x1]
      %v511 = vlaneseq
      %v512 = vshrl.u32 %v511, 7
      %v513 = vsub.s32 0, %v512
      %v514 = vrot.slane %v509, %v513
      %v516 = vadd.f32 %v501, %v514
      %v517 = vadd.f32 %v502, %v514
      %v518 = vadd.f32 %v503, %v514
      %v519 = vadd.f32 %v504, %v514
      %v520 = vadd.f32 %v505, %v514
      %v521 = vadd.f32 %v506, %v514
      %v522 = vadd.f32 %v507, %v514
      %v523 = vadd.f32 %v508, %v514
      %v524 = vmax.f32 %v516, 0.0
      %v525 = vmax.f32 %v517, 0.0
      %v526 = vmax.f32 %v518, 0.0
      %v527 = vmax.f32 %v519, 0.0
      %v528 = vmax.f32 %v520, 0.0
      %v529 = vmax.f32 %v521, 0.0
      %v530 = vmax.f32 %v522, 0.0
      %v531 = vmax.f32 %v523, 0.0
      %v532 = vpack.c.bf16 %v525, %v524
      %v533 = vpack.c.bf16 %v527, %v526
      %v534 = vpack.c.bf16 %v529, %v528
      %v535 = vpack.c.bf16 %v531, %v530
      %v540 = vunpack.c.l.b16 %v532
      %v541 = vunpack.c.h.b16 %v532
      %v542 = vunpack.c.l.b16 %v533
      %v543 = vunpack.c.h.b16 %v533
      %v544 = vunpack.c.l.b16 %v534
      %v545 = vunpack.c.h.b16 %v534
      %v546 = vunpack.c.l.b16 %v535
      %v547 = vunpack.c.h.b16 %v535
      %v548 = vpack.c.b16 %v540, %v540
      %v549 = vpack.c.b16 %v541, %v541
      %v550 = vpack.c.b16 %v542, %v542
      %v551 = vpack.c.b16 %v543, %v543
      %v552 = vpack.c.b16 %v544, %v544
      %v553 = vpack.c.b16 %v545, %v545
      %v554 = vpack.c.b16 %v546, %v546
      %v555 = vpack.c.b16 %v547, %v547
      %564 = vst [vmem:[%s289] sm:$0xf] %v548
      %565 = vst [vmem:[%s289 + $0x4] sm:$0xf] %v549
      %566 = vst [vmem:[%s289 + $0x8] sm:$0xf] %v550
      %567 = vst [vmem:[%s289 + $0xc] sm:$0xf] %v551
      %568 = vst [vmem:[%s289 + $0x10] sm:$0xf] %v552
      %569 = vst [vmem:[%s289 + $0x14] sm:$0xf] %v553
      %570 = vst [vmem:[%s289 + $0x18] sm:$0xf] %v554
      %571 = vst [vmem:[%s289 + $0x1c] sm:$0xf] %v555
      %s572 = smul.u32 8, %s18
      %p573 = scmp.lt.s32.totalorder %s572, 15
      %s574 = scalar_select %p573, %s572, 15
      %s575 = smul.addr %s574, 4
      %s576 = scalar_lea.vmem %s5, %s575
      %s577 = smul.u32 8, %s18
      %p578 = scmp.lt.s32.totalorder %s577, 15
      %s579 = scalar_select %p578, %s577, 15
      %s580 = smul.addr %s579, 4
      %s581 = scalar_lea.vmem %s6, %s580
      // Predicated region
      $region41: #{_lambda_.9} parent=39 // pred_check
        %p582 = pneg %p151
      $region42: #{_lambda_.9} parent=39 // pred_check_branch
        %584 = sbr.rel (%p582) target = $region44
      $region43: #{_lambda_.9} parent=39 // pred_region
        %s585 = smul.u32 8, %s18
      $region44: #{_lambda_.9} parent=39 // pred_fallthru
        _
      // Predicated region
      $region45: #{_lambda_.9} parent=39 // pred_check
        %p586 = pneg %p177
      $region46: #{_lambda_.9} parent=39 // pred_check_branch
        %588 = sbr.rel (%p586) target = $region48
      $region47: #{_lambda_.9} parent=39 // pred_region
        %s589 = smul.u32 8, %s18
      $region48: #{_lambda_.9} parent=39 // pred_fallthru
        _
    $region40: #{_lambda_.9} parent=5 // pred_fallthru
      _
    %p590 = scmp.le.s32.totalorder 2, %s13
    // Predicated region
    $region49: #{_lambda_.9} parent=5 // pred_check
      %p591 = pneg %p590
    $region50: #{_lambda_.9} parent=5 // pred_check_branch
      %593 = sbr.rel (%p591) target = $region52
    $region51: #{_lambda_.9} parent=5 // pred_region
      %s594 = ssub.s32 %s13, 2
      // Predicated region
      $region53: #{_lambda_.9} parent=51 // pred_check
        %p595 = pneg %p157
      $region54: #{_lambda_.9} parent=51 // pred_check_branch
        %597 = sbr.rel (%p595) target = $region56
      $region55: #{_lambda_.9} parent=51 // pred_region
        %s598 = smul.u32 8, %s19
        %p599 = scmp.lt.s32.totalorder %s598, 15
        %s600 = scalar_select %p599, %s598, 15
        %s601 = smul.addr %s600, 4
        %s602 = scalar_lea.vmem %s5, %s601
      $region56: #{_lambda_.9} parent=51 // pred_fallthru
        _
      // Predicated region
      $region57: #{_lambda_.9} parent=51 // pred_check
        %p603 = pneg %p183
      $region58: #{_lambda_.9} parent=51 // pred_check_branch
        %605 = sbr.rel (%p603) target = $region60
      $region59: #{_lambda_.9} parent=51 // pred_region
        %s606 = smul.u32 8, %s19
        %p607 = scmp.lt.s32.totalorder %s606, 15
        %s608 = scalar_select %p607, %s606, 15
        %s609 = smul.addr %s608, 4
        %s610 = scalar_lea.vmem %s6, %s609
      $region60: #{_lambda_.9} parent=51 // pred_fallthru
        _
    $region52: #{_lambda_.9} parent=5 // pred_fallthru
      _
  $region6: #{_lambda_.9} parent=0 // loop_footer
    %s17 = sadd.s32 1, %s13
  $region7: #{_lambda_.9} parent=0 // loop_footer_branch
    %12 = sbr.rel target = $region3
  $region8: #{_lambda_.9} parent=0 // loop_exit
    _

</llo_original>
